<compile_context>
chip_gen: v5e
topology: v5e:2x2
jax: 0.10.0
libtpu: 0.0.40
codegen_flags: <defaults>
</compile_context>

<pallas_src>
import functools

import jax
import jax.numpy as jnp
from jax.experimental import pallas as pl
from jax.experimental.pallas import tpu as pltpu


def _round_up(x, m):
    return (x + m - 1) // m * m


# ----------------------------------------------------------------------------
# Kernel 1: tiled matmul + bias (+ReLU).  bf16 MXU operands, f32 accumulation.
# ----------------------------------------------------------------------------
def _matmul_bias_act_kernel(x_ref, w_ref, b_ref, o_ref, *, relu):
    acc = jnp.dot(x_ref[...], w_ref[...], preferred_element_type=jnp.float32)
    acc = acc + b_ref[...]
    if relu:
        acc = jnp.maximum(acc, 0.0)
    o_ref[...] = acc.astype(o_ref.dtype)


def matmul_bias_act(x, w, b, *, relu, out_dtype=jnp.bfloat16, tm_cap=256, tn_cap=512):
    """x:(M,K) bf16; w:(K,Np) bf16 with Np % 128 == 0; b:(1,Np) f32.  Returns (M,Np)."""
    M, K = x.shape
    Kw, Np = w.shape
    assert K == Kw and Np % 128 == 0 and b.shape == (1, Np)

    # M tiling (sublane-friendly, multiple of 16 for bf16 outputs).
    Mp = _round_up(max(M, 8), 16)
    tm = Mp if Mp <= tm_cap else tm_cap
    Mp = _round_up(Mp, tm)
    # N tiling (lane-dense, multiples of 128).
    if Np <= tn_cap:
        tn = Np
    else:
        tn = tn_cap
        while Np % tn:
            tn //= 2

    if Mp != M:
        x = jnp.pad(x, ((0, Mp - M), (0, 0)))

    kernel = functools.partial(_matmul_bias_act_kernel, relu=relu)
    out = pl.pallas_call(
        kernel,
        out_shape=jax.ShapeDtypeStruct((Mp, Np), out_dtype),
        grid=(Mp // tm, Np // tn),
        in_specs=[
            pl.BlockSpec((tm, K), lambda i, j: (i, 0)),
            pl.BlockSpec((K, tn), lambda i, j: (0, j)),
            pl.BlockSpec((1, tn), lambda i, j: (0, j)),
        ],
        out_specs=pl.BlockSpec((tm, tn), lambda i, j: (i, j)),
        compiler_params=pltpu.CompilerParams(
            dimension_semantics=("parallel", "parallel")),
    )(x, w, b)
    return out[:M]


# ----------------------------------------------------------------------------
# Conv2d(k=3, s=2, p=1) + ReLU, NHWC, via channels-last im2col + Pallas matmul.
# ----------------------------------------------------------------------------
def conv3x3_s2_p1_relu(x, wm, bm, cin):
    """x:(B,H,W,Cs) bf16 with real channels [:cin]; wm:(9*cin,128k) bf16; bm:(1,128k) f32."""
    B, H, W, _ = x.shape
    k, s, p = 3, 2, 1
    Ho = (H + 2 * p - k) // s + 1
    Wo = (W + 2 * p - k) // s + 1
    xp = jnp.pad(x[..., :cin], ((0, 0), (p, p), (p, p), (0, 0)))
    cols = [xp[:, dh:dh + s * Ho:s, dw:dw + s * Wo:s, :]
            for dh in range(k) for dw in range(k)]
    patches = jnp.concatenate(cols, axis=-1).reshape(B * Ho * Wo, k * k * cin)
    out = matmul_bias_act(patches, wm, bm, relu=True, out_dtype=jnp.bfloat16)
    return out.reshape(B, Ho, Wo, -1)


# ----------------------------------------------------------------------------
# Kernel 2: fused projection + categorical straight-through head.
# Grid iterates over the independent latent groups (one 256-code softmax each).
# ----------------------------------------------------------------------------
def _proj_categorical_kernel(x_ref, w_ref, b_ref, g_ref, zt_ref, probs_ref, *,
                             num_codes, unimix, inv_temperature):
    # Projection tile for one latent group: (Bp,K) @ (K,C) -> (Bp,C) f32 accumulation.
    logits = jnp.dot(x_ref[...], w_ref[...], preferred_element_type=jnp.float32)
    logits = logits + b_ref[...]

    # learned probs = softmax(logits); exact reciprocal (user-facing output).
    m1 = jnp.max(logits, axis=-1, keepdims=True)
    e1 = jnp.exp(logits - m1)
    learned = e1 * pl.reciprocal(jnp.sum(e1, axis=-1, keepdims=True), approx=False)
    probs_ref[0] = learned

    # unimix mixture with uniform.
    mixture = (1.0 - unimix) * learned + (unimix / num_codes)

    # gumbel-perturbed logits, soft one-hot (approx recip: only feeds the ST residual).
    g = (jnp.log(mixture) + g_ref[0]) * inv_temperature
    m2 = jnp.max(g, axis=-1, keepdims=True)
    e2 = jnp.exp(g - m2)
    soft = e2 * pl.reciprocal(jnp.sum(e2, axis=-1, keepdims=True), approx=True)

    # hard one-hot at argmax of g (== argmax of soft), ties -> lowest index.
    iota = jax.lax.broadcasted_iota(jnp.int32, g.shape, 1)
    idx = jnp.min(jnp.where(g == m2, iota, num_codes), axis=-1, keepdims=True)
    hard = (iota == idx).astype(jnp.float32)

    # straight-through value (forward equals `hard` up to f32 rounding, like the ref).
    zt_ref[0] = hard - jax.lax.stop_gradient(soft) + soft


def fused_projection_categorical(x, w, b, gumbels, *, num_latents, num_codes,
                                 unimix, temperature):
    """x:(Bp,K) bf16; w:(K,L*C) bf16; b:(1,L*C) f32; gumbels:(L,Bp,C) f32."""
    Bp, K = x.shape
    kernel = functools.partial(
        _proj_categorical_kernel, num_codes=num_codes, unimix=unimix,
        inv_temperature=1.0 / temperature)
    zt, probs = pl.pallas_call(
        kernel,
        out_shape=(
            jax.ShapeDtypeStruct((num_latents, Bp, num_codes), jnp.float32),
            jax.ShapeDtypeStruct((num_latents, Bp, num_codes), jnp.float32),
        ),
        grid=(num_latents,),
        in_specs=[
            pl.BlockSpec((Bp, K), lambda l: (0, 0)),            # resident across grid
            pl.BlockSpec((K, num_codes), lambda l: (0, l)),     # weight column tile
            pl.BlockSpec((1, num_codes), lambda l: (0, l)),
            pl.BlockSpec((1, Bp, num_codes), lambda l: (l, 0, 0)),
        ],
        out_specs=[
            pl.BlockSpec((1, Bp, num_codes), lambda l: (l, 0, 0)),
            pl.BlockSpec((1, Bp, num_codes), lambda l: (l, 0, 0)),
        ],
        compiler_params=pltpu.CompilerParams(dimension_semantics=("parallel",)),
    )(x, w, b, gumbels)
    return zt, probs


# ----------------------------------------------------------------------------
# Encoder (image + recurrent path)
# ----------------------------------------------------------------------------
class EncoderPallas:
    def __init__(self, recurrent_size, image_size, img_channels,
                 num_codes=256, num_latents=10, unimix=0.01, temperature=1.0,
                 key=jax.random.PRNGKey(42)):
        self.num_codes = num_codes
        self.num_latents = num_latents
        self.unimix = float(unimix)
        self.temperature = float(temperature)

        keys = jax.random.split(key, 10)
        channels = [img_channels, 16, 32, 64, 128]
        self.conv_params = []
        for li in range(4):
            cin, cout = channels[li], channels[li + 1]
            fan_in = cin * 9
            bound = 1.0 / (fan_in ** 0.5)
            w = jax.random.uniform(keys[2 * li], (cout, cin, 3, 3),
                                   jnp.float32, -bound, bound)
            b = jax.random.uniform(keys[2 * li + 1], (cout,),
                                   jnp.float32, -bound, bound)
            # (kh, kw, cin) row order matches the NHWC im2col; pad Cout -> 128 lanes.
            wm = jnp.transpose(w, (2, 3, 1, 0)).reshape(cin * 9, cout)
            npad = _round_up(cout, 128)
            wm = jnp.pad(wm, ((0, 0), (0, npad - cout))).astype(jnp.bfloat16)
            bm = jnp.pad(b, (0, npad - cout)).reshape(1, npad).astype(jnp.float32)
            self.conv_params.append((wm, bm, cin))

        proj_in = recurrent_size + 128 * (image_size[0] // 16) * (image_size[1] // 16)
        proj_out = num_latents * num_codes
        bound = 1.0 / (proj_in ** 0.5)
        # Stored pre-transposed (in, out) and cast once at init.
        self.proj_w = jax.random.uniform(keys[8], (proj_in, proj_out),
                                         jnp.float32, -bound, bound).astype(jnp.bfloat16)
        self.proj_b = jax.random.uniform(keys[9], (1, proj_out),
                                         jnp.float32, -bound, bound)

    def __call__(self, recurrent, img, gumbel_key, probs=False):
        B = recurrent.shape[0]

        # NCHW -> NHWC once at the boundary; MXU operands in bf16.
        x = jnp.transpose(img, (0, 2, 3, 1)).astype(jnp.bfloat16)
        for wm, bm, cin in self.conv_params:
            x = conv3x3_s2_p1_relu(x, wm, bm, cin)

        # Match PyTorch's channel-major flatten of the (tiny) final feature map.
        image_lat = jnp.transpose(x, (0, 3, 1, 2)).reshape(B, -1)
        combined = jnp.concatenate(
            [image_lat, recurrent.astype(jnp.bfloat16)], axis=-1)

        Bp = _round_up(max(B, 8), 8)
        if Bp != B:
            combined = jnp.pad(combined, ((0, Bp - B), (0, 0)))

        gumbels = jax.random.gumbel(
            gumbel_key, (self.num_latents, Bp, self.num_codes), jnp.float32)

        zt, learned = fused_projection_categorical(
            combined, self.proj_w, self.proj_b, gumbels,
            num_latents=self.num_latents, num_codes=self.num_codes,
            unimix=self.unimix, temperature=self.temperature)

        # (L, Bp, C) -> batch-major views matching the reference module.
        learned = jnp.transpose(learned, (1, 0, 2))[:B].reshape(
            B * self.num_latents, self.num_codes)
        if probs:
            return learned
        zt = jnp.transpose(zt, (1, 0, 2))[:B].reshape(
            B, self.num_latents * self.num_codes)
        return zt


# ----------------------------------------------------------------------------
if __name__ == "__main__":
    key = jax.random.PRNGKey(0)
    k_img, k_rec, k_gumbel, k_params = jax.random.split(key, 4)

    B, C, H, W = 2, 4, 16, 16
    recurrent_size = 32

    enc = EncoderPallas(recurrent_size=recurrent_size,
                        image_size=(H, W), img_channels=C, key=k_params)

    img = jax.random.normal(k_img, (B, C, H, W), jnp.float32)
    recurrent = jax.random.normal(k_rec, (B, recurrent_size), jnp.float32)

    @functools.partial(jax.jit, static_argnames=("probs",))
    def run(rec, im, gkey, probs=False):
        return enc(rec, im, gkey, probs=probs)

    zt = jax.block_until_ready(run(recurrent, img, k_gumbel))
    assert zt.shape == (B, enc.num_latents * enc.num_codes), zt.shape
    # Each latent slot must be a (straight-through) one-hot -> sums to 1.
    sums = zt.reshape(B, enc.num_latents, enc.num_codes).sum(-1)
    assert bool(jnp.allclose(sums, 1.0, atol=1e-3)), sums

    lp = jax.block_until_ready(run(recurrent, img, k_gumbel, probs=True))
    assert lp.shape == (B * enc.num_latents, enc.num_codes), lp.shape
    assert bool(jnp.allclose(lp.sum(-1), 1.0, atol=1e-3))

    print("KERNEL_OK")
</pallas_src>

<mosaic_0001>
module attributes {stable_mosaic.version = 11 : i64} {
  func.func @_matmul_bias_act_kernel(%arg0: i32, %arg1: i32, %arg2: memref<128x36xbf16, #tpu.memory_space<vmem>>, %arg3: memref<36x128xbf16, #tpu.memory_space<vmem>>, %arg4: memref<1x128xf32, #tpu.memory_space<vmem>>, %arg5: memref<128x128xbf16, #tpu.memory_space<vmem>>) attributes {dimension_semantics = [#tpu.dimension_semantics<parallel>, #tpu.dimension_semantics<parallel>], iteration_bounds = array<i64: 1, 1>, scalar_prefetch = 0 : i64, scratch_operands = 0 : i64, tpu.core_type = #tpu.core_type<tc>, window_params = [{transform_indices = @transform_0, window_bounds = array<i64: 128, 36>}, {transform_indices = @transform_1, window_bounds = array<i64: 36, 128>}, {transform_indices = @transform_2, window_bounds = array<i64: 1, 128>}, {transform_indices = @transform_3, window_bounds = array<i64: 128, 128>}]} {
    %c0 = arith.constant 0 : index
    %c0_0 = arith.constant 0 : index
    %0 = vector.load %arg2[%c0, %c0_0] : memref<128x36xbf16, #tpu.memory_space<vmem>>, vector<128x36xbf16>
    %c0_1 = arith.constant 0 : index
    %c0_2 = arith.constant 0 : index
    %1 = vector.load %arg3[%c0_1, %c0_2] : memref<36x128xbf16, #tpu.memory_space<vmem>>, vector<36x128xbf16>
    %cst = arith.constant dense<0.000000e+00> : vector<128x128xf32>
    %2 = tpu.matmul %0, %1, %cst {dimension_numbers = #tpu.dot_dimension_numbers<[1], [0], [0], [1], [0, 0, 1, 1], [], []>} : vector<128x36xbf16>, vector<36x128xbf16>, vector<128x128xf32> -> vector<128x128xf32>
    %c0_3 = arith.constant 0 : index
    %c0_4 = arith.constant 0 : index
    %3 = vector.load %arg4[%c0_3, %c0_4] : memref<1x128xf32, #tpu.memory_space<vmem>>, vector<1x128xf32>
    %4 = vector.broadcast %3 : vector<1x128xf32> to vector<128x128xf32>
    %5 = arith.addf %2, %4 : vector<128x128xf32>
    %cst_5 = arith.constant 0.000000e+00 : f32
    %6 = vector.broadcast %cst_5 : f32 to vector<128x128xf32>
    %7 = arith.maximumf %5, %6 : vector<128x128xf32>
    %8 = arith.truncf %7 : vector<128x128xf32> to vector<128x128xbf16>
    %c0_6 = arith.constant 0 : index
    %c0_7 = arith.constant 0 : index
    %9 = vector.load %arg5[%c0_6, %c0_7] : memref<128x128xbf16, #tpu.memory_space<vmem>>, vector<128x128xbf16>
    tpu.vector_store %arg5[%c0_6, %c0_7], %8 {strides = array<i32>} : memref<128x128xbf16, #tpu.memory_space<vmem>>, vector<128x128xbf16>,
    return
  }
  func.func @transform_0(%arg0: i32, %arg1: i32) -> (i32, i32) {
    %c0_i32 = arith.constant 0 : i32
    %c0_i32_0 = arith.constant 0 : i32
    return %arg0, %c0_i32 : i32, i32
  }
  func.func @transform_1(%arg0: i32, %arg1: i32) -> (i32, i32) {
    %c0_i32 = arith.constant 0 : i32
    %c0_i32_0 = arith.constant 0 : i32
    return %c0_i32, %arg1 : i32, i32
  }
  func.func @transform_2(%arg0: i32, %arg1: i32) -> (i32, i32) {
    %c0_i32 = arith.constant 0 : i32
    %c0_i32_0 = arith.constant 0 : i32
    return %c0_i32, %arg1 : i32, i32
  }
  func.func @transform_3(%arg0: i32, %arg1: i32) -> (i32, i32) {
    %c0_i32 = arith.constant 0 : i32
    return %arg0, %arg1 : i32, i32
  }
}

module attributes {stable_mosaic.version = 11 : i64} {
  func.func @_matmul_bias_act_kernel(%arg0: i32, %arg1: i32, %arg2: memref<32x144xbf16, #tpu.memory_space<vmem>>, %arg3: memref<144x128xbf16, #tpu.memory_space<vmem>>, %arg4: memref<1x128xf32, #tpu.memory_space<vmem>>, %arg5: memref<32x128xbf16, #tpu.memory_space<vmem>>) attributes {dimension_semantics = [#tpu.dimension_semantics<parallel>, #tpu.dimension_semantics<parallel>], iteration_bounds = array<i64: 1, 1>, scalar_prefetch = 0 : i64, scratch_operands = 0 : i64, tpu.core_type = #tpu.core_type<tc>, window_params = [{transform_indices = @transform_0, window_bounds = array<i64: 32, 144>}, {transform_indices = @transform_1, window_bounds = array<i64: 144, 128>}, {transform_indices = @transform_2, window_bounds = array<i64: 1, 128>}, {transform_indices = @transform_3, window_bounds = array<i64: 32, 128>}]} {
    %c0 = arith.constant 0 : index
    %c0_0 = arith.constant 0 : index
    %0 = vector.load %arg2[%c0, %c0_0] : memref<32x144xbf16, #tpu.memory_space<vmem>>, vector<32x144xbf16>
    %c0_1 = arith.constant 0 : index
    %c0_2 = arith.constant 0 : index
    %1 = vector.load %arg3[%c0_1, %c0_2] : memref<144x128xbf16, #tpu.memory_space<vmem>>, vector<144x128xbf16>
    %cst = arith.constant dense<0.000000e+00> : vector<32x128xf32>
    %2 = tpu.matmul %0, %1, %cst {dimension_numbers = #tpu.dot_dimension_numbers<[1], [0], [0], [1], [0, 0, 1, 1], [], []>} : vector<32x144xbf16>, vector<144x128xbf16>, vector<32x128xf32> -> vector<32x128xf32>
    %c0_3 = arith.constant 0 : index
    %c0_4 = arith.constant 0 : index
    %3 = vector.load %arg4[%c0_3, %c0_4] : memref<1x128xf32, #tpu.memory_space<vmem>>, vector<1x128xf32>
    %4 = vector.broadcast %3 : vector<1x128xf32> to vector<32x128xf32>
    %5 = arith.addf %2, %4 : vector<32x128xf32>
    %cst_5 = arith.constant 0.000000e+00 : f32
    %6 = vector.broadcast %cst_5 : f32 to vector<32x128xf32>
    %7 = arith.maximumf %5, %6 : vector<32x128xf32>
    %8 = arith.truncf %7 : vector<32x128xf32> to vector<32x128xbf16>
    %c0_6 = arith.constant 0 : index
    %c0_7 = arith.constant 0 : index
    %9 = vector.load %arg5[%c0_6, %c0_7] : memref<32x128xbf16, #tpu.memory_space<vmem>>, vector<32x128xbf16>
    tpu.vector_store %arg5[%c0_6, %c0_7], %8 {strides = array<i32>} : memref<32x128xbf16, #tpu.memory_space<vmem>>, vector<32x128xbf16>,
    return
  }
  func.func @transform_0(%arg0: i32, %arg1: i32) -> (i32, i32) {
    %c0_i32 = arith.constant 0 : i32
    %c0_i32_0 = arith.constant 0 : i32
    return %arg0, %c0_i32 : i32, i32
  }
  func.func @transform_1(%arg0: i32, %arg1: i32) -> (i32, i32) {
    %c0_i32 = arith.constant 0 : i32
    %c0_i32_0 = arith.constant 0 : i32
    return %c0_i32, %arg1 : i32, i32
  }
  func.func @transform_2(%arg0: i32, %arg1: i32) -> (i32, i32) {
    %c0_i32 = arith.constant 0 : i32
    %c0_i32_0 = arith.constant 0 : i32
    return %c0_i32, %arg1 : i32, i32
  }
  func.func @transform_3(%arg0: i32, %arg1: i32) -> (i32, i32) {
    %c0_i32 = arith.constant 0 : i32
    return %arg0, %arg1 : i32, i32
  }
}

module attributes {stable_mosaic.version = 11 : i64} {
  func.func @_matmul_bias_act_kernel(%arg0: i32, %arg1: i32, %arg2: memref<16x288xbf16, #tpu.memory_space<vmem>>, %arg3: memref<288x128xbf16, #tpu.memory_space<vmem>>, %arg4: memref<1x128xf32, #tpu.memory_space<vmem>>, %arg5: memref<16x128xbf16, #tpu.memory_space<vmem>>) attributes {dimension_semantics = [#tpu.dimension_semantics<parallel>, #tpu.dimension_semantics<parallel>], iteration_bounds = array<i64: 1, 1>, scalar_prefetch = 0 : i64, scratch_operands = 0 : i64, tpu.core_type = #tpu.core_type<tc>, window_params = [{transform_indices = @transform_0, window_bounds = array<i64: 16, 288>}, {transform_indices = @transform_1, window_bounds = array<i64: 288, 128>}, {transform_indices = @transform_2, window_bounds = array<i64: 1, 128>}, {transform_indices = @transform_3, window_bounds = array<i64: 16, 128>}]} {
    %c0 = arith.constant 0 : index
    %c0_0 = arith.constant 0 : index
    %0 = vector.load %arg2[%c0, %c0_0] : memref<16x288xbf16, #tpu.memory_space<vmem>>, vector<16x288xbf16>
    %c0_1 = arith.constant 0 : index
    %c0_2 = arith.constant 0 : index
    %1 = vector.load %arg3[%c0_1, %c0_2] : memref<288x128xbf16, #tpu.memory_space<vmem>>, vector<288x128xbf16>
    %cst = arith.constant dense<0.000000e+00> : vector<16x128xf32>
    %2 = tpu.matmul %0, %1, %cst {dimension_numbers = #tpu.dot_dimension_numbers<[1], [0], [0], [1], [0, 0, 1, 1], [], []>} : vector<16x288xbf16>, vector<288x128xbf16>, vector<16x128xf32> -> vector<16x128xf32>
    %c0_3 = arith.constant 0 : index
    %c0_4 = arith.constant 0 : index
    %3 = vector.load %arg4[%c0_3, %c0_4] : memref<1x128xf32, #tpu.memory_space<vmem>>, vector<1x128xf32>
    %4 = vector.broadcast %3 : vector<1x128xf32> to vector<16x128xf32>
    %5 = arith.addf %2, %4 : vector<16x128xf32>
    %cst_5 = arith.constant 0.000000e+00 : f32
    %6 = vector.broadcast %cst_5 : f32 to vector<16x128xf32>
    %7 = arith.maximumf %5, %6 : vector<16x128xf32>
    %8 = arith.truncf %7 : vector<16x128xf32> to vector<16x128xbf16>
    %c0_6 = arith.constant 0 : index
    %c0_7 = arith.constant 0 : index
    %9 = vector.load %arg5[%c0_6, %c0_7] : memref<16x128xbf16, #tpu.memory_space<vmem>>, vector<16x128xbf16>
    tpu.vector_store %arg5[%c0_6, %c0_7], %8 {strides = array<i32>} : memref<16x128xbf16, #tpu.memory_space<vmem>>, vector<16x128xbf16>,
    return
  }
  func.func @transform_0(%arg0: i32, %arg1: i32) -> (i32, i32) {
    %c0_i32 = arith.constant 0 : i32
    %c0_i32_0 = arith.constant 0 : i32
    return %arg0, %c0_i32 : i32, i32
  }
  func.func @transform_1(%arg0: i32, %arg1: i32) -> (i32, i32) {
    %c0_i32 = arith.constant 0 : i32
    %c0_i32_0 = arith.constant 0 : i32
    return %c0_i32, %arg1 : i32, i32
  }
  func.func @transform_2(%arg0: i32, %arg1: i32) -> (i32, i32) {
    %c0_i32 = arith.constant 0 : i32
    %c0_i32_0 = arith.constant 0 : i32
    return %c0_i32, %arg1 : i32, i32
  }
  func.func @transform_3(%arg0: i32, %arg1: i32) -> (i32, i32) {
    %c0_i32 = arith.constant 0 : i32
    return %arg0, %arg1 : i32, i32
  }
}

module attributes {stable_mosaic.version = 11 : i64} {
  func.func @_matmul_bias_act_kernel(%arg0: i32, %arg1: i32, %arg2: memref<16x576xbf16, #tpu.memory_space<vmem>>, %arg3: memref<576x128xbf16, #tpu.memory_space<vmem>>, %arg4: memref<1x128xf32, #tpu.memory_space<vmem>>, %arg5: memref<16x128xbf16, #tpu.memory_space<vmem>>) attributes {dimension_semantics = [#tpu.dimension_semantics<parallel>, #tpu.dimension_semantics<parallel>], iteration_bounds = array<i64: 1, 1>, scalar_prefetch = 0 : i64, scratch_operands = 0 : i64, tpu.core_type = #tpu.core_type<tc>, window_params = [{transform_indices = @transform_0, window_bounds = array<i64: 16, 576>}, {transform_indices = @transform_1, window_bounds = array<i64: 576, 128>}, {transform_indices = @transform_2, window_bounds = array<i64: 1, 128>}, {transform_indices = @transform_3, window_bounds = array<i64: 16, 128>}]} {
    %c0 = arith.constant 0 : index
    %c0_0 = arith.constant 0 : index
    %0 = vector.load %arg2[%c0, %c0_0] : memref<16x576xbf16, #tpu.memory_space<vmem>>, vector<16x576xbf16>
    %c0_1 = arith.constant 0 : index
    %c0_2 = arith.constant 0 : index
    %1 = vector.load %arg3[%c0_1, %c0_2] : memref<576x128xbf16, #tpu.memory_space<vmem>>, vector<576x128xbf16>
    %cst = arith.constant dense<0.000000e+00> : vector<16x128xf32>
    %2 = tpu.matmul %0, %1, %cst {dimension_numbers = #tpu.dot_dimension_numbers<[1], [0], [0], [1], [0, 0, 1, 1], [], []>} : vector<16x576xbf16>, vector<576x128xbf16>, vector<16x128xf32> -> vector<16x128xf32>
    %c0_3 = arith.constant 0 : index
    %c0_4 = arith.constant 0 : index
    %3 = vector.load %arg4[%c0_3, %c0_4] : memref<1x128xf32, #tpu.memory_space<vmem>>, vector<1x128xf32>
    %4 = vector.broadcast %3 : vector<1x128xf32> to vector<16x128xf32>
    %5 = arith.addf %2, %4 : vector<16x128xf32>
    %cst_5 = arith.constant 0.000000e+00 : f32
    %6 = vector.broadcast %cst_5 : f32 to vector<16x128xf32>
    %7 = arith.maximumf %5, %6 : vector<16x128xf32>
    %8 = arith.truncf %7 : vector<16x128xf32> to vector<16x128xbf16>
    %c0_6 = arith.constant 0 : index
    %c0_7 = arith.constant 0 : index
    %9 = vector.load %arg5[%c0_6, %c0_7] : memref<16x128xbf16, #tpu.memory_space<vmem>>, vector<16x128xbf16>
    tpu.vector_store %arg5[%c0_6, %c0_7], %8 {strides = array<i32>} : memref<16x128xbf16, #tpu.memory_space<vmem>>, vector<16x128xbf16>,
    return
  }
  func.func @transform_0(%arg0: i32, %arg1: i32) -> (i32, i32) {
    %c0_i32 = arith.constant 0 : i32
    %c0_i32_0 = arith.constant 0 : i32
    return %arg0, %c0_i32 : i32, i32
  }
  func.func @transform_1(%arg0: i32, %arg1: i32) -> (i32, i32) {
    %c0_i32 = arith.constant 0 : i32
    %c0_i32_0 = arith.constant 0 : i32
    return %c0_i32, %arg1 : i32, i32
  }
  func.func @transform_2(%arg0: i32, %arg1: i32) -> (i32, i32) {
    %c0_i32 = arith.constant 0 : i32
    %c0_i32_0 = arith.constant 0 : i32
    return %c0_i32, %arg1 : i32, i32
  }
  func.func @transform_3(%arg0: i32, %arg1: i32) -> (i32, i32) {
    %c0_i32 = arith.constant 0 : i32
    return %arg0, %arg1 : i32, i32
  }
}

module attributes {stable_mosaic.version = 11 : i64} {
  func.func @_proj_categorical_kernel(%arg0: i32, %arg1: memref<8x160xbf16, #tpu.memory_space<vmem>>, %arg2: memref<160x256xbf16, #tpu.memory_space<vmem>>, %arg3: memref<1x256xf32, #tpu.memory_space<vmem>>, %arg4: memref<1x8x256xf32, #tpu.memory_space<vmem>>, %arg5: memref<1x8x256xf32, #tpu.memory_space<vmem>>, %arg6: memref<1x8x256xf32, #tpu.memory_space<vmem>>) attributes {dimension_semantics = [#tpu.dimension_semantics<parallel>], iteration_bounds = array<i64: 10>, scalar_prefetch = 0 : i64, scratch_operands = 0 : i64, tpu.core_type = #tpu.core_type<tc>, window_params = [{pipeline_mode = #tpu.pipeline_mode<synchronous>, transform_indices = @transform_0, window_bounds = array<i64: 8, 160>}, {transform_indices = @transform_1, window_bounds = array<i64: 160, 256>}, {transform_indices = @transform_2, window_bounds = array<i64: 1, 256>}, {transform_indices = @transform_3, window_bounds = array<i64: 1, 8, 256>}, {transform_indices = @transform_4, window_bounds = array<i64: 1, 8, 256>}, {transform_indices = @transform_5, window_bounds = array<i64: 1, 8, 256>}]} {
    %c0 = arith.constant 0 : index
    %c0_0 = arith.constant 0 : index
    %0 = vector.load %arg1[%c0, %c0_0] : memref<8x160xbf16, #tpu.memory_space<vmem>>, vector<8x160xbf16>
    %c0_1 = arith.constant 0 : index
    %c0_2 = arith.constant 0 : index
    %1 = vector.load %arg2[%c0_1, %c0_2] : memref<160x256xbf16, #tpu.memory_space<vmem>>, vector<160x256xbf16>
    %cst = arith.constant dense<0.000000e+00> : vector<8x256xf32>
    %2 = tpu.matmul %0, %1, %cst {dimension_numbers = #tpu.dot_dimension_numbers<[1], [0], [0], [1], [0, 0, 1, 1], [], []>} : vector<8x160xbf16>, vector<160x256xbf16>, vector<8x256xf32> -> vector<8x256xf32>
    %c0_3 = arith.constant 0 : index
    %c0_4 = arith.constant 0 : index
    %3 = vector.load %arg3[%c0_3, %c0_4] : memref<1x256xf32, #tpu.memory_space<vmem>>, vector<1x256xf32>
    %4 = vector.broadcast %3 : vector<1x256xf32> to vector<8x256xf32>
    %5 = arith.addf %2, %4 : vector<8x256xf32>
    %cst_5 = arith.constant dense<0xFF800000> : vector<8xf32>
    %6 = vector.multi_reduction <maximumf>, %5, %cst_5 [1] : vector<8x256xf32> to vector<8xf32>
    %7 = vector.shape_cast %6 : vector<8xf32> to vector<8x1xf32>
    %8 = vector.broadcast %7 : vector<8x1xf32> to vector<8x256xf32>
    %9 = arith.subf %5, %8 : vector<8x256xf32>
    %10 = math.exp %9 : vector<8x256xf32>
    %cst_6 = arith.constant dense<0.000000e+00> : vector<8xf32>
    %11 = vector.multi_reduction <add>, %10, %cst_6 [1] : vector<8x256xf32> to vector<8xf32>
    %12 = vector.shape_cast %11 : vector<8xf32> to vector<8x1xf32>
    %13 = tpu.reciprocal %12 : vector<8x1xf32> -> vector<8x1xf32>
    %14 = vector.broadcast %13 : vector<8x1xf32> to vector<8x256xf32>
    %15 = arith.mulf %10, %14 : vector<8x256xf32>
    %c0_7 = arith.constant 0 : index
    %c0_8 = arith.constant 0 : index
    %c0_9 = arith.constant 0 : index
    %16 = vector.load %arg6[%c0_7, %c0_8, %c0_9] : memref<1x8x256xf32, #tpu.memory_space<vmem>>, vector<1x8x256xf32>
    %17 = vector.shape_cast %16 : vector<1x8x256xf32> to vector<8x256xf32>
    %18 = vector.shape_cast %15 : vector<8x256xf32> to vector<1x8x256xf32>
    tpu.vector_store %arg6[%c0_7, %c0_8, %c0_9], %18 {strides = array<i32>} : memref<1x8x256xf32, #tpu.memory_space<vmem>>, vector<1x8x256xf32>,
    %cst_10 = arith.constant 9.900000e-01 : f32
    %19 = vector.broadcast %cst_10 : f32 to vector<8x256xf32>
    %20 = arith.mulf %19, %15 : vector<8x256xf32>
    %cst_11 = arith.constant 3.906250e-05 : f32
    %21 = vector.broadcast %cst_11 : f32 to vector<8x256xf32>
    %22 = arith.addf %20, %21 : vector<8x256xf32>
    %23 = math.log %22 : vector<8x256xf32>
    %c0_12 = arith.constant 0 : index
    %c0_13 = arith.constant 0 : index
    %c0_14 = arith.constant 0 : index
    %24 = vector.load %arg4[%c0_12, %c0_13, %c0_14] : memref<1x8x256xf32, #tpu.memory_space<vmem>>, vector<1x8x256xf32>
    %25 = vector.shape_cast %24 : vector<1x8x256xf32> to vector<8x256xf32>
    %26 = arith.addf %23, %25 : vector<8x256xf32>
    %cst_15 = arith.constant 1.000000e+00 : f32
    %27 = vector.broadcast %cst_15 : f32 to vector<8x256xf32>
    %28 = arith.mulf %26, %27 : vector<8x256xf32>
    %cst_16 = arith.constant dense<0xFF800000> : vector<8xf32>
    %29 = vector.multi_reduction <maximumf>, %28, %cst_16 [1] : vector<8x256xf32> to vector<8xf32>
    %30 = vector.shape_cast %29 : vector<8xf32> to vector<8x1xf32>
    %31 = vector.broadcast %30 : vector<8x1xf32> to vector<8x256xf32>
    %32 = arith.subf %28, %31 : vector<8x256xf32>
    %33 = math.exp %32 : vector<8x256xf32>
    %cst_17 = arith.constant dense<0.000000e+00> : vector<8xf32>
    %34 = vector.multi_reduction <add>, %33, %cst_17 [1] : vector<8x256xf32> to vector<8xf32>
    %35 = vector.shape_cast %34 : vector<8xf32> to vector<8x1xf32>
    %36 = tpu.reciprocal %35 {approx = true} : vector<8x1xf32> -> vector<8x1xf32>
    %37 = vector.broadcast %36 : vector<8x1xf32> to vector<8x256xf32>
    %38 = arith.mulf %33, %37 : vector<8x256xf32>
    %39 = tpu.iota {dimensions = array<i32: 1>} : vector<8x256xi32>
    %40 = vector.broadcast %30 : vector<8x1xf32> to vector<8x256xf32>
    %41 = arith.cmpf oeq, %28, %40 : vector<8x256xf32>
    %c256_i32 = arith.constant 256 : i32
    %42 = vector.broadcast %c256_i32 : i32 to vector<8x256xi32>
    %43 = arith.select %41, %39, %42 : vector<8x256xi1>, vector<8x256xi32>
    %cst_18 = arith.constant dense<2147483647> : vector<8xi32>
    %44 = vector.multi_reduction <minsi>, %43, %cst_18 [1] : vector<8x256xi32> to vector<8xi32>
    %45 = vector.shape_cast %44 : vector<8xi32> to vector<8x1xi32>
    %46 = vector.broadcast %45 : vector<8x1xi32> to vector<8x256xi32>
    %47 = arith.cmpi eq, %39, %46 : vector<8x256xi32>
    %48 = arith.extui %47 : vector<8x256xi1> to vector<8x256xi32>
    %49 = arith.sitofp %48 : vector<8x256xi32> to vector<8x256xf32>
    %50 = arith.subf %49, %38 : vector<8x256xf32>
    %51 = arith.addf %50, %38 : vector<8x256xf32>
    %c0_19 = arith.constant 0 : index
    %c0_20 = arith.constant 0 : index
    %c0_21 = arith.constant 0 : index
    %52 = vector.load %arg5[%c0_19, %c0_20, %c0_21] : memref<1x8x256xf32, #tpu.memory_space<vmem>>, vector<1x8x256xf32>
    %53 = vector.shape_cast %52 : vector<1x8x256xf32> to vector<8x256xf32>
    %54 = vector.shape_cast %51 : vector<8x256xf32> to vector<1x8x256xf32>
    tpu.vector_store %arg5[%c0_19, %c0_20, %c0_21], %54 {strides = array<i32>} : memref<1x8x256xf32, #tpu.memory_space<vmem>>, vector<1x8x256xf32>,
    return
  }
  func.func @transform_0(%arg0: i32) -> (i32, i32) {
    %c0_i32 = arith.constant 0 : i32
    %c0_i32_0 = arith.constant 0 : i32
    %c0_i32_1 = arith.constant 0 : i32
    return %c0_i32, %c0_i32_0 : i32, i32
  }
  func.func @transform_1(%arg0: i32) -> (i32, i32) {
    %c0_i32 = arith.constant 0 : i32
    %c0_i32_0 = arith.constant 0 : i32
    return %c0_i32, %arg0 : i32, i32
  }
  func.func @transform_2(%arg0: i32) -> (i32, i32) {
    %c0_i32 = arith.constant 0 : i32
    %c0_i32_0 = arith.constant 0 : i32
    return %c0_i32, %arg0 : i32, i32
  }
  func.func @transform_3(%arg0: i32) -> (i32, i32, i32) {
    %c0_i32 = arith.constant 0 : i32
    %c0_i32_0 = arith.constant 0 : i32
    %c0_i32_1 = arith.constant 0 : i32
    return %arg0, %c0_i32, %c0_i32_0 : i32, i32, i32
  }
  func.func @transform_4(%arg0: i32) -> (i32, i32, i32) {
    %c0_i32 = arith.constant 0 : i32
    %c0_i32_0 = arith.constant 0 : i32
    %c0_i32_1 = arith.constant 0 : i32
    return %arg0, %c0_i32, %c0_i32_0 : i32, i32, i32
  }
  func.func @transform_5(%arg0: i32) -> (i32, i32, i32) {
    %c0_i32 = arith.constant 0 : i32
    %c0_i32_0 = arith.constant 0 : i32
    %c0_i32_1 = arith.constant 0 : i32
    return %arg0, %c0_i32, %c0_i32_0 : i32, i32, i32
  }
}

</mosaic_0001>

<llo_original>
// kernel: run.5
$region0: #{run.5}
  #allocation0 [shape = 'u32[]', space=smem, size = 0x4, offset = 0x4, fixed_abs, tag = 'smem constant byte address 0x4 - core index']
  #allocation1 [shape = 'u32[72,128]{1,0:T(1,128)}', space=vmem, size = 0x9000, scoped, tag = 'internal scratch']
  %s0 = inlined_call_operand.vmem [shape: bf16[128,36], index: 0, kind: input, shape index: {}]
  %s1 = inlined_call_operand.vmem [shape: bf16[36,128], index: 1, kind: input, shape index: {}]
  %s2 = inlined_call_operand.vmem [shape: f32[1,128], index: 2, kind: input, shape index: {}]
  %s3 = inlined_call_operand.vmem [shape: bf16[128,128], index: 3, kind: output, shape index: {}]
  %s4 = sld [smem:[#allocation0]]
  $region22: #{run.5} parent=0
    _
  %s6 = ssub.s32 1, %s4
  %s7 = scalar_select 0, %s6, %s4
  // Predicated region
  $region2: #{run.5} parent=0 // pred_check
    _
  $region3: #{run.5} parent=0 // pred_check_branch
    %9 = sbr.rel (0) target = $region5
  $region4: #{run.5} parent=0 // pred_region
    _
  $region5: #{run.5} parent=0 // pred_fallthru
    _
  // Predicated region
  $region6: #{run.5} parent=0 // pred_check
    _
  $region7: #{run.5} parent=0 // pred_check_branch
    %11 = sbr.rel (0) target = $region9
  $region8: #{run.5} parent=0 // pred_region
    _
  $region9: #{run.5} parent=0 // pred_fallthru
    _
  // Predicated region
  $region10: #{run.5} parent=0 // pred_check
    _
  $region11: #{run.5} parent=0 // pred_check_branch
    %13 = sbr.rel (0) target = $region13
  $region12: #{run.5} parent=0 // pred_region
    _
  $region13: #{run.5} parent=0 // pred_fallthru
    _
  %v15 = vld [vmem:[%s0] sm:$0xf]
  %v16 = vld [vmem:[%s0 + $0x4] sm:$0xf]
  %v17 = vld [vmem:[%s0 + $0x8] sm:$0xf]
  %v18 = vld [vmem:[%s0 + $0xc] sm:$0xf]
  %v19 = vld [vmem:[%s0 + $0x10] sm:$0xf]
  %v20 = vld [vmem:[%s0 + $0x14] sm:$0xf]
  %v21 = vld [vmem:[%s0 + $0x18] sm:$0xf]
  %v22 = vld [vmem:[%s0 + $0x1c] sm:$0xf]
  %v23 = vld [vmem:[%s0 + $0x20] sm:$0xf]
  %v24 = vld [vmem:[%s0 + $0x24] sm:$0xf]
  %v25 = vld [vmem:[%s0 + $0x28] sm:$0xf]
  %v26 = vld [vmem:[%s0 + $0x2c] sm:$0xf]
  %v27 = vld [vmem:[%s0 + $0x30] sm:$0xf]
  %v28 = vld [vmem:[%s0 + $0x34] sm:$0xf]
  %v29 = vld [vmem:[%s0 + $0x38] sm:$0xf]
  %v30 = vld [vmem:[%s0 + $0x3c] sm:$0xf]
  %v31 = vld [vmem:[%s1] sm:$0xf]
  %v32 = vld [vmem:[%s1 + $0x4] sm:$0xf]
  %v33 = vld [vmem:[%s1 + $0x8] sm:$0xf]
  %v34 = vld [vmem:[%s1 + $0xc] sm:$0xf]
  %v35 = vld [vmem:[%s1 + $0x10] sm:$0x3]
  %v36 = vld [vmem:[%s2] sm:$0x1]
  %v38 = vperm.slane %v36, 0
  %v56 = vunpack.c.l.b16 %v15
  %v57 = vunpack.c.l.b16 %v16
  %v58 = vunpack.c.l.b16 %v17
  %v59 = vunpack.c.l.b16 %v18
  %v60 = vunpack.c.l.b16 %v19
  %v61 = vunpack.c.l.b16 %v20
  %v62 = vunpack.c.l.b16 %v21
  %v63 = vunpack.c.l.b16 %v22
  %v64 = vunpack.c.l.b16 %v23
  %v65 = vunpack.c.l.b16 %v24
  %v66 = vunpack.c.l.b16 %v25
  %v67 = vunpack.c.l.b16 %v26
  %v68 = vunpack.c.l.b16 %v27
  %v69 = vunpack.c.l.b16 %v28
  %v70 = vunpack.c.l.b16 %v29
  %v71 = vunpack.c.l.b16 %v30
  %v72 = vpack.c.b16 %v57, %v56
  %v73 = vpack.c.b16 %v59, %v58
  %v74 = vpack.c.b16 %v61, %v60
  %v75 = vpack.c.b16 %v63, %v62
  %v76 = vpack.c.b16 %v65, %v64
  %v77 = vpack.c.b16 %v67, %v66
  %v78 = vpack.c.b16 %v69, %v68
  %v79 = vpack.c.b16 %v71, %v70
  %v85 = vunpack.c.l.b16 %v31
  %v86 = vunpack.c.l.b16 %v32
  %v87 = vunpack.c.l.b16 %v33
  %v88 = vunpack.c.l.b16 %v34
  %v89 = vunpack.c.l.b16 %v35
  %v90 = vpack.c.b16 %v86, %v85
  %v91 = vpack.c.b16 %v88, %v87
  %v92 = vpack.c.b16 %v89, %v89
  %vm95 = vcmask 293888
  %v97 = vsel %vm95, %v72, 0
  %v100 = vsel %vm95, %v73, 0
  %v103 = vsel %vm95, %v74, 0
  %v106 = vsel %vm95, %v75, 0
  %v109 = vsel %vm95, %v76, 0
  %v112 = vsel %vm95, %v77, 0
  %v115 = vsel %vm95, %v78, 0
  %v118 = vsel %vm95, %v79, 0
  %vm120 = vcmask 1041408
  %v122 = vsel %vm120, %v92, 0
  %124 = vmatpush.bf16.msra.mxu0 0
  %125 = vmatpush.bf16.msra.mxu0 0
  %126 = vmatpush.bf16.msra.mxu0 0
  %127 = vmatpush.bf16.msra.mxu0 0
  %128 = vmatpush.bf16.msra.mxu0 0
  %129 = vmatpush.bf16.msra.mxu0 %v122
  %130 = vmatpush.bf16.msra.mxu0 %v91
  %131 = vmatpush.bf16.msra.mxu0 %v90
  %132 = vmatmul.bf16.gmra.mxu0 %v97
  %v133 = vpop.f32.mrf.mxu0
  %v134 = vadd.f32 %v38, %v133
  %v135 = vpop.f32.mrf.mxu0
  %v136 = vadd.f32 %v38, %v135
  %137 = vmatmul.bf16.gmra.mxu0 %v100
  %v138 = vpop.f32.mrf.mxu0
  %v139 = vadd.f32 %v38, %v138
  %v140 = vpop.f32.mrf.mxu0
  %v141 = vadd.f32 %v38, %v140
  %142 = vmatmul.bf16.gmra.mxu0 %v103
  %v143 = vpop.f32.mrf.mxu0
  %v144 = vadd.f32 %v38, %v143
  %v145 = vpop.f32.mrf.mxu0
  %v146 = vadd.f32 %v38, %v145
  %147 = vmatmul.bf16.gmra.mxu0 %v106
  %v148 = vpop.f32.mrf.mxu0
  %v149 = vadd.f32 %v38, %v148
  %v150 = vpop.f32.mrf.mxu0
  %v151 = vadd.f32 %v38, %v150
  %152 = vmatmul.bf16.gmra.mxu0 %v109
  %v153 = vpop.f32.mrf.mxu0
  %v154 = vadd.f32 %v38, %v153
  %v155 = vpop.f32.mrf.mxu0
  %v156 = vadd.f32 %v38, %v155
  %157 = vmatmul.bf16.gmra.mxu0 %v112
  %v158 = vpop.f32.mrf.mxu0
  %v159 = vadd.f32 %v38, %v158
  %v160 = vpop.f32.mrf.mxu0
  %v161 = vadd.f32 %v38, %v160
  %162 = vmatmul.bf16.gmra.mxu0 %v115
  %v163 = vpop.f32.mrf.mxu0
  %v164 = vadd.f32 %v38, %v163
  %v165 = vpop.f32.mrf.mxu0
  %v166 = vadd.f32 %v38, %v165
  %167 = vmatmul.bf16.gmra.mxu0 %v118
  %v168 = vpop.f32.mrf.mxu0
  %v169 = vadd.f32 %v38, %v168
  %v170 = vpop.f32.mrf.mxu0
  %v171 = vadd.f32 %v38, %v170
  %172 = vdwg.mxu0
  %v173 = vmax.f32 %v134, 0.0
  %v174 = vmax.f32 %v136, 0.0
  %v175 = vmax.f32 %v139, 0.0
  %v176 = vmax.f32 %v141, 0.0
  %v177 = vmax.f32 %v144, 0.0
  %v178 = vmax.f32 %v146, 0.0
  %v179 = vmax.f32 %v149, 0.0
  %v180 = vmax.f32 %v151, 0.0
  %v181 = vmax.f32 %v154, 0.0
  %v182 = vmax.f32 %v156, 0.0
  %v183 = vmax.f32 %v159, 0.0
  %v184 = vmax.f32 %v161, 0.0
  %v185 = vmax.f32 %v164, 0.0
  %v186 = vmax.f32 %v166, 0.0
  %v187 = vmax.f32 %v169, 0.0
  %v188 = vmax.f32 %v171, 0.0
  %v189 = vpack.c.bf16 %v173, %v173
  %v190 = vpack.c.bf16 %v174, %v174
  %v191 = vpack.c.bf16 %v175, %v175
  %v192 = vpack.c.bf16 %v176, %v176
  %v193 = vpack.c.bf16 %v177, %v177
  %v194 = vpack.c.bf16 %v178, %v178
  %v195 = vpack.c.bf16 %v179, %v179
  %v196 = vpack.c.bf16 %v180, %v180
  %v197 = vpack.c.bf16 %v181, %v181
  %v198 = vpack.c.bf16 %v182, %v182
  %v199 = vpack.c.bf16 %v183, %v183
  %v200 = vpack.c.bf16 %v184, %v184
  %v201 = vpack.c.bf16 %v185, %v185
  %v202 = vpack.c.bf16 %v186, %v186
  %v203 = vpack.c.bf16 %v187, %v187
  %v204 = vpack.c.bf16 %v188, %v188
  %205 = vst [vmem:[%s3] sm:$0xf] %v189
  %206 = vst [vmem:[%s3 + $0x4] sm:$0xf] %v190
  %207 = vst [vmem:[%s3 + $0x8] sm:$0xf] %v191
  %208 = vst [vmem:[%s3 + $0xc] sm:$0xf] %v192
  %209 = vst [vmem:[%s3 + $0x10] sm:$0xf] %v193
  %210 = vst [vmem:[%s3 + $0x14] sm:$0xf] %v194
  %211 = vst [vmem:[%s3 + $0x18] sm:$0xf] %v195
  %212 = vst [vmem:[%s3 + $0x1c] sm:$0xf] %v196
  %213 = vst [vmem:[%s3 + $0x20] sm:$0xf] %v197
  %214 = vst [vmem:[%s3 + $0x24] sm:$0xf] %v198
  %215 = vst [vmem:[%s3 + $0x28] sm:$0xf] %v199
  %216 = vst [vmem:[%s3 + $0x2c] sm:$0xf] %v200
  %217 = vst [vmem:[%s3 + $0x30] sm:$0xf] %v201
  %218 = vst [vmem:[%s3 + $0x34] sm:$0xf] %v202
  %219 = vst [vmem:[%s3 + $0x38] sm:$0xf] %v203
  %220 = vst [vmem:[%s3 + $0x3c] sm:$0xf] %v204
  // Predicated region
  $region14: #{run.5} parent=0 // pred_check
    _
  $region15: #{run.5} parent=0 // pred_check_branch
    %222 = sbr.rel (0) target = $region17
  $region16: #{run.5} parent=0 // pred_region
    _
  $region17: #{run.5} parent=0 // pred_fallthru
    _
  // Predicated region
  $region18: #{run.5} parent=0 // pred_check
    _
  $region19: #{run.5} parent=0 // pred_check_branch
    %224 = sbr.rel (0) target = $region21
  $region20: #{run.5} parent=0 // pred_region
    _
  $region21: #{run.5} parent=0 // pred_fallthru
    _

// kernel: run.6
$region0: #{run.6}
  #allocation0 [shape = 'u32[]', space=smem, size = 0x4, offset = 0x4, fixed_abs, tag = 'smem constant byte address 0x4 - core index']
  #allocation1 [shape = 'u32[72,128]{1,0:T(1,128)}', space=vmem, size = 0x9000, scoped, tag = 'internal scratch']
  %s0 = inlined_call_operand.vmem [shape: bf16[32,144], index: 0, kind: input, shape index: {}]
  %s1 = inlined_call_operand.vmem [shape: bf16[144,128], index: 1, kind: input, shape index: {}]
  %s2 = inlined_call_operand.vmem [shape: f32[1,128], index: 2, kind: input, shape index: {}]
  %s3 = inlined_call_operand.vmem [shape: bf16[32,128], index: 3, kind: output, shape index: {}]
  %s4 = sld [smem:[#allocation0]]
  $region22: #{run.6} parent=0
    _
  %s6 = ssub.s32 1, %s4
  %s7 = scalar_select 0, %s6, %s4
  // Predicated region
  $region2: #{run.6} parent=0 // pred_check
    _
  $region3: #{run.6} parent=0 // pred_check_branch
    %9 = sbr.rel (0) target = $region5
  $region4: #{run.6} parent=0 // pred_region
    _
  $region5: #{run.6} parent=0 // pred_fallthru
    _
  // Predicated region
  $region6: #{run.6} parent=0 // pred_check
    _
  $region7: #{run.6} parent=0 // pred_check_branch
    %11 = sbr.rel (0) target = $region9
  $region8: #{run.6} parent=0 // pred_region
    _
  $region9: #{run.6} parent=0 // pred_fallthru
    _
  // Predicated region
  $region10: #{run.6} parent=0 // pred_check
    _
  $region11: #{run.6} parent=0 // pred_check_branch
    %13 = sbr.rel (0) target = $region13
  $region12: #{run.6} parent=0 // pred_region
    _
  $region13: #{run.6} parent=0 // pred_fallthru
    _
  %v15 = vld [vmem:[%s0] sm:$0xff]
  %v16 = vld [vmem:[%s0 + $0x8] sm:$0xff]
  %v17 = vld [vmem:[%s0 + $0x10] sm:$0xff]
  %v18 = vld [vmem:[%s0 + $0x18] sm:$0xff]
  %v19 = vld [vmem:[%s1] sm:$0xf]
  %v20 = vld [vmem:[%s1 + $0x4] sm:$0xf]
  %v21 = vld [vmem:[%s1 + $0x8] sm:$0xf]
  %v22 = vld [vmem:[%s1 + $0xc] sm:$0xf]
  %v23 = vld [vmem:[%s1 + $0x10] sm:$0xf]
  %v24 = vld [vmem:[%s1 + $0x14] sm:$0xf]
  %v25 = vld [vmem:[%s1 + $0x18] sm:$0xf]
  %v26 = vld [vmem:[%s1 + $0x1c] sm:$0xf]
  %v27 = vld [vmem:[%s1 + $0x20] sm:$0xf]
  %v28 = vld [vmem:[%s1 + $0x24] sm:$0xf]
  %v29 = vld [vmem:[%s1 + $0x28] sm:$0xf]
  %v30 = vld [vmem:[%s1 + $0x2c] sm:$0xf]
  %v31 = vld [vmem:[%s1 + $0x30] sm:$0xf]
  %v32 = vld [vmem:[%s1 + $0x34] sm:$0xf]
  %v33 = vld [vmem:[%s1 + $0x38] sm:$0xf]
  %v34 = vld [vmem:[%s1 + $0x3c] sm:$0xf]
  %v35 = vld [vmem:[%s1 + $0x40] sm:$0xf]
  %v36 = vld [vmem:[%s1 + $0x44] sm:$0xf]
  %v37 = vld [vmem:[%s2] sm:$0x1]
  %v39 = vperm.slane %v37, 0
  %v45 = vunpack.c.l.b16 %v15
  %v46 = vunpack.c.h.b16 %v15
  %v47 = vunpack.c.l.b16 %v16
  %v48 = vunpack.c.h.b16 %v16
  %v49 = vunpack.c.l.b16 %v17
  %v50 = vunpack.c.h.b16 %v17
  %v51 = vunpack.c.l.b16 %v18
  %v52 = vunpack.c.h.b16 %v18
  %v53 = vpack.c.b16 %v47, %v45
  %v54 = vpack.c.b16 %v48, %v46
  %v55 = vpack.c.b16 %v51, %v49
  %v56 = vpack.c.b16 %v52, %v50
  %v77 = vunpack.c.l.b16 %v19
  %v78 = vunpack.c.l.b16 %v20
  %v79 = vunpack.c.l.b16 %v21
  %v80 = vunpack.c.l.b16 %v22
  %v81 = vunpack.c.l.b16 %v23
  %v82 = vunpack.c.l.b16 %v24
  %v83 = vunpack.c.l.b16 %v25
  %v84 = vunpack.c.l.b16 %v26
  %v85 = vunpack.c.l.b16 %v27
  %v86 = vunpack.c.l.b16 %v28
  %v87 = vunpack.c.l.b16 %v29
  %v88 = vunpack.c.l.b16 %v30
  %v89 = vunpack.c.l.b16 %v31
  %v90 = vunpack.c.l.b16 %v32
  %v91 = vunpack.c.l.b16 %v33
  %v92 = vunpack.c.l.b16 %v34
  %v93 = vunpack.c.l.b16 %v35
  %v94 = vunpack.c.l.b16 %v36
  %v95 = vpack.c.b16 %v78, %v77
  %v96 = vpack.c.b16 %v80, %v79
  %v97 = vpack.c.b16 %v82, %v81
  %v98 = vpack.c.b16 %v84, %v83
  %v99 = vpack.c.b16 %v86, %v85
  %v100 = vpack.c.b16 %v88, %v87
  %v101 = vpack.c.b16 %v90, %v89
  %v102 = vpack.c.b16 %v92, %v91
  %v103 = vpack.c.b16 %v94, %v93
  %vm113 = vcmask 130048
  %v115 = vsel %vm113, %v54, 0
  %v118 = vsel %vm113, %v56, 0
  %120 = vmatpush.bf16.msra.mxu0 %v102
  %121 = vmatpush.bf16.msra.mxu0 %v101
  %122 = vmatpush.bf16.msra.mxu0 %v100
  %123 = vmatpush.bf16.msra.mxu0 %v99
  %124 = vmatpush.bf16.msra.mxu0 %v98
  %125 = vmatpush.bf16.msra.mxu0 %v97
  %126 = vmatpush.bf16.msra.mxu0 %v96
  %127 = vmatpush.bf16.msra.mxu0 %v95
  %128 = vmatmul.bf16.gmra.mxu0 %v53
  %v129 = vpop.f32.mrf.mxu0
  %v130 = vadd.f32 %v39, %v129
  %v131 = vpop.f32.mrf.mxu0
  %v132 = vadd.f32 %v39, %v131
  %133 = vmatmul.bf16.gmra.mxu0 %v55
  %v134 = vpop.f32.mrf.mxu0
  %v135 = vadd.f32 %v39, %v134
  %v136 = vpop.f32.mrf.mxu0
  %v137 = vadd.f32 %v39, %v136
  %138 = vdwg.mxu0
  %139 = vmatpush.bf16.msra.mxu0 0
  %140 = vmatpush.bf16.msra.mxu0 0
  %141 = vmatpush.bf16.msra.mxu0 0
  %142 = vmatpush.bf16.msra.mxu0 0
  %143 = vmatpush.bf16.msra.mxu0 0
  %144 = vmatpush.bf16.msra.mxu0 0
  %145 = vmatpush.bf16.msra.mxu0 0
  %146 = vmatpush.bf16.msra.mxu0 %v103
  %147 = vmatmul.bf16.gmra.mxu0 %v115
  %v148 = vpop.f32.mrf.mxu0
  %v149 = vadd.f32 %v130, %v148
  %v150 = vpop.f32.mrf.mxu0
  %v151 = vadd.f32 %v132, %v150
  %152 = vmatmul.bf16.gmra.mxu0 %v118
  %v153 = vpop.f32.mrf.mxu0
  %v154 = vadd.f32 %v135, %v153
  %v155 = vpop.f32.mrf.mxu0
  %v156 = vadd.f32 %v137, %v155
  %157 = vdwg.mxu0
  %v158 = vmax.f32 %v149, 0.0
  %v159 = vmax.f32 %v151, 0.0
  %v160 = vmax.f32 %v154, 0.0
  %v161 = vmax.f32 %v156, 0.0
  %v162 = vpack.c.bf16 %v158, %v158
  %v163 = vpack.c.bf16 %v159, %v159
  %v164 = vpack.c.bf16 %v160, %v160
  %v165 = vpack.c.bf16 %v161, %v161
  %166 = vst [vmem:[%s3] sm:$0xf] %v162
  %167 = vst [vmem:[%s3 + $0x4] sm:$0xf] %v163
  %168 = vst [vmem:[%s3 + $0x8] sm:$0xf] %v164
  %169 = vst [vmem:[%s3 + $0xc] sm:$0xf] %v165
  // Predicated region
  $region14: #{run.6} parent=0 // pred_check
    _
  $region15: #{run.6} parent=0 // pred_check_branch
    %171 = sbr.rel (0) target = $region17
  $region16: #{run.6} parent=0 // pred_region
    _
  $region17: #{run.6} parent=0 // pred_fallthru
    _
  // Predicated region
  $region18: #{run.6} parent=0 // pred_check
    _
  $region19: #{run.6} parent=0 // pred_check_branch
    %173 = sbr.rel (0) target = $region21
  $region20: #{run.6} parent=0 // pred_region
    _
  $region21: #{run.6} parent=0 // pred_fallthru
    _

// kernel: run.7
$region0: #{run.7}
  #allocation0 [shape = 'u32[]', space=smem, size = 0x4, offset = 0x4, fixed_abs, tag = 'smem constant byte address 0x4 - core index']
  #allocation1 [shape = 'u32[72,128]{1,0:T(1,128)}', space=vmem, size = 0x9000, scoped, tag = 'internal scratch']
  %s0 = inlined_call_operand.vmem [shape: bf16[16,288], index: 0, kind: input, shape index: {}]
  %s1 = inlined_call_operand.vmem [shape: bf16[288,128], index: 1, kind: input, shape index: {}]
  %s2 = inlined_call_operand.vmem [shape: f32[1,128], index: 2, kind: input, shape index: {}]
  %s3 = inlined_call_operand.vmem [shape: bf16[16,128], index: 3, kind: output, shape index: {}]
  %s4 = sld [smem:[#allocation0]]
  $region22: #{run.7} parent=0
    _
  %s6 = ssub.s32 1, %s4
  %s7 = scalar_select 0, %s6, %s4
  // Predicated region
  $region2: #{run.7} parent=0 // pred_check
    _
  $region3: #{run.7} parent=0 // pred_check_branch
    %9 = sbr.rel (0) target = $region5
  $region4: #{run.7} parent=0 // pred_region
    _
  $region5: #{run.7} parent=0 // pred_fallthru
    _
  // Predicated region
  $region6: #{run.7} parent=0 // pred_check
    _
  $region7: #{run.7} parent=0 // pred_check_branch
    %11 = sbr.rel (0) target = $region9
  $region8: #{run.7} parent=0 // pred_region
    _
  $region9: #{run.7} parent=0 // pred_fallthru
    _
  // Predicated region
  $region10: #{run.7} parent=0 // pred_check
    _
  $region11: #{run.7} parent=0 // pred_check_branch
    %13 = sbr.rel (0) target = $region13
  $region12: #{run.7} parent=0 // pred_region
    _
  $region13: #{run.7} parent=0 // pred_fallthru
    _
  %v15 = vld [vmem:[%s0] sm:$0xff]
  %v16 = vld [vmem:[%s0 + $0x8] sm:$0xf]
  %v17 = vld [vmem:[%s0 + $0xc] sm:$0xff]
  %v18 = vld [vmem:[%s0 + $0x14] sm:$0xf]
  %v19 = vld [vmem:[%s1] sm:$0xf]
  %v20 = vld [vmem:[%s1 + $0x4] sm:$0xf]
  %v21 = vld [vmem:[%s1 + $0x8] sm:$0xf]
  %v22 = vld [vmem:[%s1 + $0xc] sm:$0xf]
  %v23 = vld [vmem:[%s1 + $0x10] sm:$0xf]
  %v24 = vld [vmem:[%s1 + $0x14] sm:$0xf]
  %v25 = vld [vmem:[%s1 + $0x18] sm:$0xf]
  %v26 = vld [vmem:[%s1 + $0x1c] sm:$0xf]
  %v27 = vld [vmem:[%s1 + $0x20] sm:$0xf]
  %v28 = vld [vmem:[%s1 + $0x24] sm:$0xf]
  %v29 = vld [vmem:[%s1 + $0x28] sm:$0xf]
  %v30 = vld [vmem:[%s1 + $0x2c] sm:$0xf]
  %v31 = vld [vmem:[%s1 + $0x30] sm:$0xf]
  %v32 = vld [vmem:[%s1 + $0x34] sm:$0xf]
  %v33 = vld [vmem:[%s1 + $0x38] sm:$0xf]
  %v34 = vld [vmem:[%s1 + $0x3c] sm:$0xf]
  %v35 = vld [vmem:[%s1 + $0x40] sm:$0xf]
  %v36 = vld [vmem:[%s1 + $0x44] sm:$0xf]
  %v37 = vld [vmem:[%s1 + $0x48] sm:$0xf]
  %v38 = vld [vmem:[%s1 + $0x4c] sm:$0xf]
  %v39 = vld [vmem:[%s1 + $0x50] sm:$0xf]
  %v40 = vld [vmem:[%s1 + $0x54] sm:$0xf]
  %v41 = vld [vmem:[%s1 + $0x58] sm:$0xf]
  %v42 = vld [vmem:[%s1 + $0x5c] sm:$0xf]
  %v43 = vld [vmem:[%s1 + $0x60] sm:$0xf]
  %v44 = vld [vmem:[%s1 + $0x64] sm:$0xf]
  %v45 = vld [vmem:[%s1 + $0x68] sm:$0xf]
  %v46 = vld [vmem:[%s1 + $0x6c] sm:$0xf]
  %v47 = vld [vmem:[%s1 + $0x70] sm:$0xf]
  %v48 = vld [vmem:[%s1 + $0x74] sm:$0xf]
  %v49 = vld [vmem:[%s1 + $0x78] sm:$0xf]
  %v50 = vld [vmem:[%s1 + $0x7c] sm:$0xf]
  %v51 = vld [vmem:[%s1 + $0x80] sm:$0xf]
  %v52 = vld [vmem:[%s1 + $0x84] sm:$0xf]
  %v53 = vld [vmem:[%s1 + $0x88] sm:$0xf]
  %v54 = vld [vmem:[%s1 + $0x8c] sm:$0xf]
  %v55 = vld [vmem:[%s2] sm:$0x1]
  %v57 = vperm.slane %v55, 0
  %v63 = vunpack.c.l.b16 %v15
  %v64 = vunpack.c.h.b16 %v15
  %v65 = vunpack.c.l.b16 %v16
  %v66 = vunpack.c.l.b16 %v17
  %v67 = vunpack.c.h.b16 %v17
  %v68 = vunpack.c.l.b16 %v18
  %v69 = vpack.c.b16 %v66, %v63
  %v70 = vpack.c.b16 %v67, %v64
  %v71 = vpack.c.b16 %v68, %v65
  %v110 = vunpack.c.l.b16 %v19
  %v111 = vunpack.c.l.b16 %v20
  %v112 = vunpack.c.l.b16 %v21
  %v113 = vunpack.c.l.b16 %v22
  %v114 = vunpack.c.l.b16 %v23
  %v115 = vunpack.c.l.b16 %v24
  %v116 = vunpack.c.l.b16 %v25
  %v117 = vunpack.c.l.b16 %v26
  %v118 = vunpack.c.l.b16 %v27
  %v119 = vunpack.c.l.b16 %v28
  %v120 = vunpack.c.l.b16 %v29
  %v121 = vunpack.c.l.b16 %v30
  %v122 = vunpack.c.l.b16 %v31
  %v123 = vunpack.c.l.b16 %v32
  %v124 = vunpack.c.l.b16 %v33
  %v125 = vunpack.c.l.b16 %v34
  %v126 = vunpack.c.l.b16 %v35
  %v127 = vunpack.c.l.b16 %v36
  %v128 = vunpack.c.l.b16 %v37
  %v129 = vunpack.c.l.b16 %v38
  %v130 = vunpack.c.l.b16 %v39
  %v131 = vunpack.c.l.b16 %v40
  %v132 = vunpack.c.l.b16 %v41
  %v133 = vunpack.c.l.b16 %v42
  %v134 = vunpack.c.l.b16 %v43
  %v135 = vunpack.c.l.b16 %v44
  %v136 = vunpack.c.l.b16 %v45
  %v137 = vunpack.c.l.b16 %v46
  %v138 = vunpack.c.l.b16 %v47
  %v139 = vunpack.c.l.b16 %v48
  %v140 = vunpack.c.l.b16 %v49
  %v141 = vunpack.c.l.b16 %v50
  %v142 = vunpack.c.l.b16 %v51
  %v143 = vunpack.c.l.b16 %v52
  %v144 = vunpack.c.l.b16 %v53
  %v145 = vunpack.c.l.b16 %v54
  %v146 = vpack.c.b16 %v111, %v110
  %v147 = vpack.c.b16 %v113, %v112
  %v148 = vpack.c.b16 %v115, %v114
  %v149 = vpack.c.b16 %v117, %v116
  %v150 = vpack.c.b16 %v119, %v118
  %v151 = vpack.c.b16 %v121, %v120
  %v152 = vpack.c.b16 %v123, %v122
  %v153 = vpack.c.b16 %v125, %v124
  %v154 = vpack.c.b16 %v127, %v126
  %v155 = vpack.c.b16 %v129, %v128
  %v156 = vpack.c.b16 %v131, %v130
  %v157 = vpack.c.b16 %v133, %v132
  %v158 = vpack.c.b16 %v135, %v134
  %v159 = vpack.c.b16 %v137, %v136
  %v160 = vpack.c.b16 %v139, %v138
  %v161 = vpack.c.b16 %v141, %v140
  %v162 = vpack.c.b16 %v143, %v142
  %v163 = vpack.c.b16 %v145, %v144
  %vm182 = vcmask 261120
  %v184 = vsel %vm182, %v71, 0
  %186 = vmatpush.bf16.msra.mxu0 %v153
  %187 = vmatpush.bf16.msra.mxu0 %v152
  %188 = vmatpush.bf16.msra.mxu0 %v151
  %189 = vmatpush.bf16.msra.mxu0 %v150
  %190 = vmatpush.bf16.msra.mxu0 %v149
  %191 = vmatpush.bf16.msra.mxu0 %v148
  %192 = vmatpush.bf16.msra.mxu0 %v147
  %193 = vmatpush.bf16.msra.mxu0 %v146
  %194 = vmatmul.bf16.gmra.mxu0 %v69
  %v195 = vpop.f32.mrf.mxu0
  %v196 = vadd.f32 %v57, %v195
  %v197 = vpop.f32.mrf.mxu0
  %v198 = vadd.f32 %v57, %v197
  %199 = vdwg.mxu0
  %200 = vmatpush.bf16.msra.mxu0 %v161
  %201 = vmatpush.bf16.msra.mxu0 %v160
  %202 = vmatpush.bf16.msra.mxu0 %v159
  %203 = vmatpush.bf16.msra.mxu0 %v158
  %204 = vmatpush.bf16.msra.mxu0 %v157
  %205 = vmatpush.bf16.msra.mxu0 %v156
  %206 = vmatpush.bf16.msra.mxu0 %v155
  %207 = vmatpush.bf16.msra.mxu0 %v154
  %208 = vmatmul.bf16.gmra.mxu0 %v70
  %v209 = vpop.f32.mrf.mxu0
  %v210 = vadd.f32 %v196, %v209
  %v211 = vpop.f32.mrf.mxu0
  %v212 = vadd.f32 %v198, %v211
  %213 = vdwg.mxu0
  %214 = vmatpush.bf16.msra.mxu0 0
  %215 = vmatpush.bf16.msra.mxu0 0
  %216 = vmatpush.bf16.msra.mxu0 0
  %217 = vmatpush.bf16.msra.mxu0 0
  %218 = vmatpush.bf16.msra.mxu0 0
  %219 = vmatpush.bf16.msra.mxu0 0
  %220 = vmatpush.bf16.msra.mxu0 %v163
  %221 = vmatpush.bf16.msra.mxu0 %v162
  %222 = vmatmul.bf16.gmra.mxu0 %v184
  %v223 = vpop.f32.mrf.mxu0
  %v224 = vadd.f32 %v210, %v223
  %v225 = vpop.f32.mrf.mxu0
  %v226 = vadd.f32 %v212, %v225
  %227 = vdwg.mxu0
  %v228 = vmax.f32 %v224, 0.0
  %v229 = vmax.f32 %v226, 0.0
  %v230 = vpack.c.bf16 %v228, %v228
  %v231 = vpack.c.bf16 %v229, %v229
  %232 = vst [vmem:[%s3] sm:$0xf] %v230
  %233 = vst [vmem:[%s3 + $0x4] sm:$0xf] %v231
  // Predicated region
  $region14: #{run.7} parent=0 // pred_check
    _
  $region15: #{run.7} parent=0 // pred_check_branch
    %235 = sbr.rel (0) target = $region17
  $region16: #{run.7} parent=0 // pred_region
    _
  $region17: #{run.7} parent=0 // pred_fallthru
    _
  // Predicated region
  $region18: #{run.7} parent=0 // pred_check
    _
  $region19: #{run.7} parent=0 // pred_check_branch
    %237 = sbr.rel (0) target = $region21
  $region20: #{run.7} parent=0 // pred_region
    _
  $region21: #{run.7} parent=0 // pred_fallthru
    _

// kernel: run.8
$region0: #{run.8}
  #allocation0 [shape = 'u32[]', space=smem, size = 0x4, offset = 0x4, fixed_abs, tag = 'smem constant byte address 0x4 - core index']
  #allocation1 [shape = 'u32[72,128]{1,0:T(1,128)}', space=vmem, size = 0x9000, scoped, tag = 'internal scratch']
  %s0 = inlined_call_operand.vmem [shape: bf16[16,576], index: 0, kind: input, shape index: {}]
  %s1 = inlined_call_operand.vmem [shape: bf16[576,128], index: 1, kind: input, shape index: {}]
  %s2 = inlined_call_operand.vmem [shape: f32[1,128], index: 2, kind: input, shape index: {}]
  %s3 = inlined_call_operand.vmem [shape: bf16[16,128], index: 3, kind: output, shape index: {}]
  %s4 = sld [smem:[#allocation0]]
  $region22: #{run.8} parent=0
    _
  %s6 = ssub.s32 1, %s4
  %s7 = scalar_select 0, %s6, %s4
  // Predicated region
  $region2: #{run.8} parent=0 // pred_check
    _
  $region3: #{run.8} parent=0 // pred_check_branch
    %9 = sbr.rel (0) target = $region5
  $region4: #{run.8} parent=0 // pred_region
    _
  $region5: #{run.8} parent=0 // pred_fallthru
    _
  // Predicated region
  $region6: #{run.8} parent=0 // pred_check
    _
  $region7: #{run.8} parent=0 // pred_check_branch
    %11 = sbr.rel (0) target = $region9
  $region8: #{run.8} parent=0 // pred_region
    _
  $region9: #{run.8} parent=0 // pred_fallthru
    _
  // Predicated region
  $region10: #{run.8} parent=0 // pred_check
    _
  $region11: #{run.8} parent=0 // pred_check_branch
    %13 = sbr.rel (0) target = $region13
  $region12: #{run.8} parent=0 // pred_region
    _
  $region13: #{run.8} parent=0 // pred_fallthru
    _
  %v15 = vld [vmem:[%s0] sm:$0xff]
  %v16 = vld [vmem:[%s0 + $0x8] sm:$0xff]
  %v17 = vld [vmem:[%s0 + $0x10] sm:$0xf]
  %v18 = vld [vmem:[%s0 + $0x14] sm:$0xff]
  %v19 = vld [vmem:[%s0 + $0x1c] sm:$0xff]
  %v20 = vld [vmem:[%s0 + $0x24] sm:$0xf]
  %v21 = vld [vmem:[%s1] sm:$0xf]
  %v22 = vld [vmem:[%s1 + $0x4] sm:$0xf]
  %v23 = vld [vmem:[%s1 + $0x8] sm:$0xf]
  %v24 = vld [vmem:[%s1 + $0xc] sm:$0xf]
  %v25 = vld [vmem:[%s1 + $0x10] sm:$0xf]
  %v26 = vld [vmem:[%s1 + $0x14] sm:$0xf]
  %v27 = vld [vmem:[%s1 + $0x18] sm:$0xf]
  %v28 = vld [vmem:[%s1 + $0x1c] sm:$0xf]
  %v29 = vld [vmem:[%s1 + $0x20] sm:$0xf]
  %v30 = vld [vmem:[%s1 + $0x24] sm:$0xf]
  %v31 = vld [vmem:[%s1 + $0x28] sm:$0xf]
  %v32 = vld [vmem:[%s1 + $0x2c] sm:$0xf]
  %v33 = vld [vmem:[%s1 + $0x30] sm:$0xf]
  %v34 = vld [vmem:[%s1 + $0x34] sm:$0xf]
  %v35 = vld [vmem:[%s1 + $0x38] sm:$0xf]
  %v36 = vld [vmem:[%s1 + $0x3c] sm:$0xf]
  %v37 = vld [vmem:[%s1 + $0x40] sm:$0xf]
  %v38 = vld [vmem:[%s1 + $0x44] sm:$0xf]
  %v39 = vld [vmem:[%s1 + $0x48] sm:$0xf]
  %v40 = vld [vmem:[%s1 + $0x4c] sm:$0xf]
  %v41 = vld [vmem:[%s1 + $0x50] sm:$0xf]
  %v42 = vld [vmem:[%s1 + $0x54] sm:$0xf]
  %v43 = vld [vmem:[%s1 + $0x58] sm:$0xf]
  %v44 = vld [vmem:[%s1 + $0x5c] sm:$0xf]
  %v45 = vld [vmem:[%s1 + $0x60] sm:$0xf]
  %v46 = vld [vmem:[%s1 + $0x64] sm:$0xf]
  %v47 = vld [vmem:[%s1 + $0x68] sm:$0xf]
  %v48 = vld [vmem:[%s1 + $0x6c] sm:$0xf]
  %v49 = vld [vmem:[%s1 + $0x70] sm:$0xf]
  %v50 = vld [vmem:[%s1 + $0x74] sm:$0xf]
  %v51 = vld [vmem:[%s1 + $0x78] sm:$0xf]
  %v52 = vld [vmem:[%s1 + $0x7c] sm:$0xf]
  %v53 = vld [vmem:[%s1 + $0x80] sm:$0xf]
  %v54 = vld [vmem:[%s1 + $0x84] sm:$0xf]
  %v55 = vld [vmem:[%s1 + $0x88] sm:$0xf]
  %v56 = vld [vmem:[%s1 + $0x8c] sm:$0xf]
  %v57 = vld [vmem:[%s1 + $0x90] sm:$0xf]
  %v58 = vld [vmem:[%s1 + $0x94] sm:$0xf]
  %v59 = vld [vmem:[%s1 + $0x98] sm:$0xf]
  %v60 = vld [vmem:[%s1 + $0x9c] sm:$0xf]
  %v61 = vld [vmem:[%s1 + $0xa0] sm:$0xf]
  %v62 = vld [vmem:[%s1 + $0xa4] sm:$0xf]
  %v63 = vld [vmem:[%s1 + $0xa8] sm:$0xf]
  %v64 = vld [vmem:[%s1 + $0xac] sm:$0xf]
  %v65 = vld [vmem:[%s1 + $0xb0] sm:$0xf]
  %v66 = vld [vmem:[%s1 + $0xb4] sm:$0xf]
  %v67 = vld [vmem:[%s1 + $0xb8] sm:$0xf]
  %v68 = vld [vmem:[%s1 + $0xbc] sm:$0xf]
  %v69 = vld [vmem:[%s1 + $0xc0] sm:$0xf]
  %v70 = vld [vmem:[%s1 + $0xc4] sm:$0xf]
  %v71 = vld [vmem:[%s1 + $0xc8] sm:$0xf]
  %v72 = vld [vmem:[%s1 + $0xcc] sm:$0xf]
  %v73 = vld [vmem:[%s1 + $0xd0] sm:$0xf]
  %v74 = vld [vmem:[%s1 + $0xd4] sm:$0xf]
  %v75 = vld [vmem:[%s1 + $0xd8] sm:$0xf]
  %v76 = vld [vmem:[%s1 + $0xdc] sm:$0xf]
  %v77 = vld [vmem:[%s1 + $0xe0] sm:$0xf]
  %v78 = vld [vmem:[%s1 + $0xe4] sm:$0xf]
  %v79 = vld [vmem:[%s1 + $0xe8] sm:$0xf]
  %v80 = vld [vmem:[%s1 + $0xec] sm:$0xf]
  %v81 = vld [vmem:[%s1 + $0xf0] sm:$0xf]
  %v82 = vld [vmem:[%s1 + $0xf4] sm:$0xf]
  %v83 = vld [vmem:[%s1 + $0xf8] sm:$0xf]
  %v84 = vld [vmem:[%s1 + $0xfc] sm:$0xf]
  %v85 = vld [vmem:[%s1 + $0x100] sm:$0xf]
  %v86 = vld [vmem:[%s1 + $0x104] sm:$0xf]
  %v87 = vld [vmem:[%s1 + $0x108] sm:$0xf]
  %v88 = vld [vmem:[%s1 + $0x10c] sm:$0xf]
  %v89 = vld [vmem:[%s1 + $0x110] sm:$0xf]
  %v90 = vld [vmem:[%s1 + $0x114] sm:$0xf]
  %v91 = vld [vmem:[%s1 + $0x118] sm:$0xf]
  %v92 = vld [vmem:[%s1 + $0x11c] sm:$0xf]
  %v93 = vld [vmem:[%s2] sm:$0x1]
  %v95 = vperm.slane %v93, 0
  %v103 = vunpack.c.l.b16 %v15
  %v104 = vunpack.c.h.b16 %v15
  %v105 = vunpack.c.l.b16 %v16
  %v106 = vunpack.c.h.b16 %v16
  %v107 = vunpack.c.l.b16 %v17
  %v108 = vunpack.c.l.b16 %v18
  %v109 = vunpack.c.h.b16 %v18
  %v110 = vunpack.c.l.b16 %v19
  %v111 = vunpack.c.h.b16 %v19
  %v112 = vunpack.c.l.b16 %v20
  %v113 = vpack.c.b16 %v108, %v103
  %v114 = vpack.c.b16 %v109, %v104
  %v115 = vpack.c.b16 %v110, %v105
  %v116 = vpack.c.b16 %v111, %v106
  %v117 = vpack.c.b16 %v112, %v107
  %v194 = vunpack.c.l.b16 %v21
  %v195 = vunpack.c.l.b16 %v22
  %v196 = vunpack.c.l.b16 %v23
  %v197 = vunpack.c.l.b16 %v24
  %v198 = vunpack.c.l.b16 %v25
  %v199 = vunpack.c.l.b16 %v26
  %v200 = vunpack.c.l.b16 %v27
  %v201 = vunpack.c.l.b16 %v28
  %v202 = vunpack.c.l.b16 %v29
  %v203 = vunpack.c.l.b16 %v30
  %v204 = vunpack.c.l.b16 %v31
  %v205 = vunpack.c.l.b16 %v32
  %v206 = vunpack.c.l.b16 %v33
  %v207 = vunpack.c.l.b16 %v34
  %v208 = vunpack.c.l.b16 %v35
  %v209 = vunpack.c.l.b16 %v36
  %v210 = vunpack.c.l.b16 %v37
  %v211 = vunpack.c.l.b16 %v38
  %v212 = vunpack.c.l.b16 %v39
  %v213 = vunpack.c.l.b16 %v40
  %v214 = vunpack.c.l.b16 %v41
  %v215 = vunpack.c.l.b16 %v42
  %v216 = vunpack.c.l.b16 %v43
  %v217 = vunpack.c.l.b16 %v44
  %v218 = vunpack.c.l.b16 %v45
  %v219 = vunpack.c.l.b16 %v46
  %v220 = vunpack.c.l.b16 %v47
  %v221 = vunpack.c.l.b16 %v48
  %v222 = vunpack.c.l.b16 %v49
  %v223 = vunpack.c.l.b16 %v50
  %v224 = vunpack.c.l.b16 %v51
  %v225 = vunpack.c.l.b16 %v52
  %v226 = vunpack.c.l.b16 %v53
  %v227 = vunpack.c.l.b16 %v54
  %v228 = vunpack.c.l.b16 %v55
  %v229 = vunpack.c.l.b16 %v56
  %v230 = vunpack.c.l.b16 %v57
  %v231 = vunpack.c.l.b16 %v58
  %v232 = vunpack.c.l.b16 %v59
  %v233 = vunpack.c.l.b16 %v60
  %v234 = vunpack.c.l.b16 %v61
  %v235 = vunpack.c.l.b16 %v62
  %v236 = vunpack.c.l.b16 %v63
  %v237 = vunpack.c.l.b16 %v64
  %v238 = vunpack.c.l.b16 %v65
  %v239 = vunpack.c.l.b16 %v66
  %v240 = vunpack.c.l.b16 %v67
  %v241 = vunpack.c.l.b16 %v68
  %v242 = vunpack.c.l.b16 %v69
  %v243 = vunpack.c.l.b16 %v70
  %v244 = vunpack.c.l.b16 %v71
  %v245 = vunpack.c.l.b16 %v72
  %v246 = vunpack.c.l.b16 %v73
  %v247 = vunpack.c.l.b16 %v74
  %v248 = vunpack.c.l.b16 %v75
  %v249 = vunpack.c.l.b16 %v76
  %v250 = vunpack.c.l.b16 %v77
  %v251 = vunpack.c.l.b16 %v78
  %v252 = vunpack.c.l.b16 %v79
  %v253 = vunpack.c.l.b16 %v80
  %v254 = vunpack.c.l.b16 %v81
  %v255 = vunpack.c.l.b16 %v82
  %v256 = vunpack.c.l.b16 %v83
  %v257 = vunpack.c.l.b16 %v84
  %v258 = vunpack.c.l.b16 %v85
  %v259 = vunpack.c.l.b16 %v86
  %v260 = vunpack.c.l.b16 %v87
  %v261 = vunpack.c.l.b16 %v88
  %v262 = vunpack.c.l.b16 %v89
  %v263 = vunpack.c.l.b16 %v90
  %v264 = vunpack.c.l.b16 %v91
  %v265 = vunpack.c.l.b16 %v92
  %v266 = vpack.c.b16 %v195, %v194
  %v267 = vpack.c.b16 %v197, %v196
  %v268 = vpack.c.b16 %v199, %v198
  %v269 = vpack.c.b16 %v201, %v200
  %v270 = vpack.c.b16 %v203, %v202
  %v271 = vpack.c.b16 %v205, %v204
  %v272 = vpack.c.b16 %v207, %v206
  %v273 = vpack.c.b16 %v209, %v208
  %v274 = vpack.c.b16 %v211, %v210
  %v275 = vpack.c.b16 %v213, %v212
  %v276 = vpack.c.b16 %v215, %v214
  %v277 = vpack.c.b16 %v217, %v216
  %v278 = vpack.c.b16 %v219, %v218
  %v279 = vpack.c.b16 %v221, %v220
  %v280 = vpack.c.b16 %v223, %v222
  %v281 = vpack.c.b16 %v225, %v224
  %v282 = vpack.c.b16 %v227, %v226
  %v283 = vpack.c.b16 %v229, %v228
  %v284 = vpack.c.b16 %v231, %v230
  %v285 = vpack.c.b16 %v233, %v232
  %v286 = vpack.c.b16 %v235, %v234
  %v287 = vpack.c.b16 %v237, %v236
  %v288 = vpack.c.b16 %v239, %v238
  %v289 = vpack.c.b16 %v241, %v240
  %v290 = vpack.c.b16 %v243, %v242
  %v291 = vpack.c.b16 %v245, %v244
  %v292 = vpack.c.b16 %v247, %v246
  %v293 = vpack.c.b16 %v249, %v248
  %v294 = vpack.c.b16 %v251, %v250
  %v295 = vpack.c.b16 %v253, %v252
  %v296 = vpack.c.b16 %v255, %v254
  %v297 = vpack.c.b16 %v257, %v256
  %v298 = vpack.c.b16 %v259, %v258
  %v299 = vpack.c.b16 %v261, %v260
  %v300 = vpack.c.b16 %v263, %v262
  %v301 = vpack.c.b16 %v265, %v264
  %vm338 = vcmask 523264
  %v340 = vsel %vm338, %v117, 0
  %342 = vmatpush.bf16.msra.mxu0 %v273
  %343 = vmatpush.bf16.msra.mxu0 %v272
  %344 = vmatpush.bf16.msra.mxu0 %v271
  %345 = vmatpush.bf16.msra.mxu0 %v270
  %346 = vmatpush.bf16.msra.mxu0 %v269
  %347 = vmatpush.bf16.msra.mxu0 %v268
  %348 = vmatpush.bf16.msra.mxu0 %v267
  %349 = vmatpush.bf16.msra.mxu0 %v266
  %350 = vmatmul.bf16.gmra.mxu0 %v113
  %v351 = vpop.f32.mrf.mxu0
  %v352 = vadd.f32 %v95, %v351
  %v353 = vpop.f32.mrf.mxu0
  %v354 = vadd.f32 %v95, %v353
  %355 = vdwg.mxu0
  %356 = vmatpush.bf16.msra.mxu0 %v281
  %357 = vmatpush.bf16.msra.mxu0 %v280
  %358 = vmatpush.bf16.msra.mxu0 %v279
  %359 = vmatpush.bf16.msra.mxu0 %v278
  %360 = vmatpush.bf16.msra.mxu0 %v277
  %361 = vmatpush.bf16.msra.mxu0 %v276
  %362 = vmatpush.bf16.msra.mxu0 %v275
  %363 = vmatpush.bf16.msra.mxu0 %v274
  %364 = vmatmul.bf16.gmra.mxu0 %v114
  %v365 = vpop.f32.mrf.mxu0
  %v366 = vadd.f32 %v352, %v365
  %v367 = vpop.f32.mrf.mxu0
  %v368 = vadd.f32 %v354, %v367
  %369 = vdwg.mxu0
  %370 = vmatpush.bf16.msra.mxu0 %v289
  %371 = vmatpush.bf16.msra.mxu0 %v288
  %372 = vmatpush.bf16.msra.mxu0 %v287
  %373 = vmatpush.bf16.msra.mxu0 %v286
  %374 = vmatpush.bf16.msra.mxu0 %v285
  %375 = vmatpush.bf16.msra.mxu0 %v284
  %376 = vmatpush.bf16.msra.mxu0 %v283
  %377 = vmatpush.bf16.msra.mxu0 %v282
  %378 = vmatmul.bf16.gmra.mxu0 %v115
  %v379 = vpop.f32.mrf.mxu0
  %v380 = vadd.f32 %v366, %v379
  %v381 = vpop.f32.mrf.mxu0
  %v382 = vadd.f32 %v368, %v381
  %383 = vdwg.mxu0
  %384 = vmatpush.bf16.msra.mxu0 %v297
  %385 = vmatpush.bf16.msra.mxu0 %v296
  %386 = vmatpush.bf16.msra.mxu0 %v295
  %387 = vmatpush.bf16.msra.mxu0 %v294
  %388 = vmatpush.bf16.msra.mxu0 %v293
  %389 = vmatpush.bf16.msra.mxu0 %v292
  %390 = vmatpush.bf16.msra.mxu0 %v291
  %391 = vmatpush.bf16.msra.mxu0 %v290
  %392 = vmatmul.bf16.gmra.mxu0 %v116
  %v393 = vpop.f32.mrf.mxu0
  %v394 = vadd.f32 %v380, %v393
  %v395 = vpop.f32.mrf.mxu0
  %v396 = vadd.f32 %v382, %v395
  %397 = vdwg.mxu0
  %398 = vmatpush.bf16.msra.mxu0 0
  %399 = vmatpush.bf16.msra.mxu0 0
  %400 = vmatpush.bf16.msra.mxu0 0
  %401 = vmatpush.bf16.msra.mxu0 0
  %402 = vmatpush.bf16.msra.mxu0 %v301
  %403 = vmatpush.bf16.msra.mxu0 %v300
  %404 = vmatpush.bf16.msra.mxu0 %v299
  %405 = vmatpush.bf16.msra.mxu0 %v298
  %406 = vmatmul.bf16.gmra.mxu0 %v340
  %v407 = vpop.f32.mrf.mxu0
  %v408 = vadd.f32 %v394, %v407
  %v409 = vpop.f32.mrf.mxu0
  %v410 = vadd.f32 %v396, %v409
  %411 = vdwg.mxu0
  %v412 = vmax.f32 %v408, 0.0
  %v413 = vmax.f32 %v410, 0.0
  %v414 = vpack.c.bf16 %v412, %v412
  %v415 = vpack.c.bf16 %v413, %v413
  %416 = vst [vmem:[%s3] sm:$0xf] %v414
  %417 = vst [vmem:[%s3 + $0x4] sm:$0xf] %v415
  // Predicated region
  $region14: #{run.8} parent=0 // pred_check
    _
  $region15: #{run.8} parent=0 // pred_check_branch
    %419 = sbr.rel (0) target = $region17
  $region16: #{run.8} parent=0 // pred_region
    _
  $region17: #{run.8} parent=0 // pred_fallthru
    _
  // Predicated region
  $region18: #{run.8} parent=0 // pred_check
    _
  $region19: #{run.8} parent=0 // pred_check_branch
    %421 = sbr.rel (0) target = $region21
  $region20: #{run.8} parent=0 // pred_region
    _
  $region21: #{run.8} parent=0 // pred_fallthru
    _

// kernel: run.9
$region0: #{run.9}
  #allocation0 [shape = 'u32[]', space=smem, size = 0x4, offset = 0x4, fixed_abs, tag = 'smem constant byte address 0x4 - core index']
  #allocation1 [shape = 'u32[72,128]{1,0:T(1,128)}', space=vmem, size = 0x9000, scoped, tag = 'internal scratch']
  %s0 = inlined_call_operand.vmem [shape: bf16[8,160], index: 0, kind: input, shape index: {}]
  %s1 = inlined_call_operand.vmem [shape: bf16[160,2560], index: 1, kind: input, shape index: {}]
  %s2 = inlined_call_operand.vmem [shape: f32[1,2560], index: 2, kind: input, shape index: {}]
  %s3 = inlined_call_operand.vmem [shape: f32[10,8,256], index: 3, kind: input, shape index: {}]
  %s4 = inlined_call_operand.vmem [shape: f32[10,8,256], index: 4, kind: output, shape index: {0}]
  %s5 = inlined_call_operand.hbm [shape: f32[10,8,256], index: 5, kind: output, shape index: {1}]
  %6 = xla_tuple %s4, %s5
  %s7 = sld [smem:[#allocation0]]
  $region95: #{run.9} parent=0
    _
  %s9 = ssub.s32 1, %s7
  %s10 = scalar_select 0, %s9, %s7
  $region1: #{run.9} parent=0
    #allocation2 [shape = 'u8[163840]{0}', space=vmem, size = 0x28000, scoped, tag = 'input window, operand 1']
    #allocation3 [shape = 'u8[16384]{0}', space=vmem, size = 0x4000, scoped, tag = 'output window, operand 1']
    #allocation4 [shape = 's32[2]{0}', space=sflag, size = 0x8, scoped, tag = 'scoped memory for run.9']
    %11 = vsyncpa [#allocation4], 0
    %s12 = scalar_lea.sflag [#allocation4], 1
    %13 = vsyncpa %s12, 0
    loop: start=0, step=1, limit=12
    $region2: #{run.9} parent=1 // loop_pre_header
      _
    $region3: #{run.9} parent=1 // loop_header
      %s15 = sphi 0, %s19
      %p16 = scmp.ge.s32.totalorder %s15, 12
      %s23 = sphi 0, %s23
      %s25 = sphi 0, %s23
      %s26 = sphi 0, %s25
      %s40 = sphi 0, %s26
      %s46 = sphi 0, %s48
      %s49 = sphi 0, %s46
      %s50 = sphi 0, %s49
      %s66 = sphi 0, %s50
      %s72 = sphi 0, %s74
      %s75 = sphi 0, %s72
      %s76 = sphi 0, %s75
      %s92 = sphi 0, %s76
      %s98 = sphi 0, %s100
      %s101 = sphi 0, %s98
      %s102 = sphi 0, %s101
      %s118 = sphi 0, %s102
      %s124 = sphi 0, %s126
      %s127 = sphi 0, %s124
      %s128 = sphi 0, %s127
      %s144 = sphi 0, %s128
      %s150 = sphi 0, %s152
      %s153 = sphi 0, %s150
      %s154 = sphi 0, %s153
      %s170 = sphi 0, %s154
    $region4: #{run.9} parent=1 // loop_header_branch
      %18 = sbr.rel (%p16) target = $region8
    $region5: #{run.9} parent=1 // loop_body
      %s20 = ssub.s32 %s15, 1
      %s21 = ssub.s32 %s15, 2
      %s22 = sadd.s32 %s15, 1
      %s24 = sadd.s32 %s23, 1
      %p27 = scmp.eq.s32.totalorder %s15, 9
      %p28 = scmp.ne.s32.totalorder %s23, %s25
      %p29 = scmp.eq.s32.totalorder %s15, 0
      %p30 = por %p28, %p29
      %p31 = scmp.ne.s32.totalorder %s23, %s25
      %p32 = scmp.eq.s32.totalorder %s20, 9
      %p33 = por %p31, %p32
      %p34 = scmp.ne.s32.totalorder %s25, %s26
      %p35 = scmp.eq.s32.totalorder %s20, 0
      %p36 = por %p34, %p35
      %p37 = scmp.ne.s32.totalorder %s25, %s26
      %p38 = scmp.eq.s32.totalorder %s21, 9
      %p39 = por %p37, %p38
      %p41 = scmp.ne.s32.totalorder %s26, %s40
      %p42 = scmp.eq.s32.totalorder %s21, 0
      %p43 = por %p41, %p42
      %s44 = ssub.s32 %s15, %s22
      %p45 = scmp.eq.s32.totalorder %s44, 0
      %s47 = sadd.s32 %s46, 1
      %s48 = scalar_select %p45, %s46, %s47
      %p51 = pneg %p45
      %p52 = scmp.eq.s32.totalorder %s15, 9
      %p53 = por %p51, %p52
      %p54 = scmp.ne.s32.totalorder %s46, %s49
      %p55 = scmp.eq.s32.totalorder %s15, 0
      %p56 = por %p54, %p55
      %p57 = scmp.ne.s32.totalorder %s46, %s49
      %p58 = scmp.eq.s32.totalorder %s20, 9
      %p59 = por %p57, %p58
      %p60 = scmp.ne.s32.totalorder %s49, %s50
      %p61 = scmp.eq.s32.totalorder %s20, 0
      %p62 = por %p60, %p61
      %p63 = scmp.ne.s32.totalorder %s49, %s50
      %p64 = scmp.eq.s32.totalorder %s21, 9
      %p65 = por %p63, %p64
      %p67 = scmp.ne.s32.totalorder %s50, %s66
      %p68 = scmp.eq.s32.totalorder %s21, 0
      %p69 = por %p67, %p68
      %s70 = ssub.s32 %s15, %s22
      %p71 = scmp.eq.s32.totalorder %s70, 0
      %s73 = sadd.s32 %s72, 1
      %s74 = scalar_select %p71, %s72, %s73
      %p77 = pneg %p71
      %p78 = scmp.eq.s32.totalorder %s15, 9
      %p79 = por %p77, %p78
      %p80 = scmp.ne.s32.totalorder %s72, %s75
      %p81 = scmp.eq.s32.totalorder %s15, 0
      %p82 = por %p80, %p81
      %p83 = scmp.ne.s32.totalorder %s72, %s75
      %p84 = scmp.eq.s32.totalorder %s20, 9
      %p85 = por %p83, %p84
      %p86 = scmp.ne.s32.totalorder %s75, %s76
      %p87 = scmp.eq.s32.totalorder %s20, 0
      %p88 = por %p86, %p87
      %p89 = scmp.ne.s32.totalorder %s75, %s76
      %p90 = scmp.eq.s32.totalorder %s21, 9
      %p91 = por %p89, %p90
      %p93 = scmp.ne.s32.totalorder %s76, %s92
      %p94 = scmp.eq.s32.totalorder %s21, 0
      %p95 = por %p93, %p94
      %s96 = ssub.s32 %s15, %s22
      %p97 = scmp.eq.s32.totalorder %s96, 0
      %s99 = sadd.s32 %s98, 1
      %s100 = scalar_select %p97, %s98, %s99
      %p103 = pneg %p97
      %p104 = scmp.eq.s32.totalorder %s15, 9
      %p105 = por %p103, %p104
      %p106 = scmp.ne.s32.totalorder %s98, %s101
      %p107 = scmp.eq.s32.totalorder %s15, 0
      %p108 = por %p106, %p107
      %p109 = scmp.ne.s32.totalorder %s98, %s101
      %p110 = scmp.eq.s32.totalorder %s20, 9
      %p111 = por %p109, %p110
      %p112 = scmp.ne.s32.totalorder %s101, %s102
      %p113 = scmp.eq.s32.totalorder %s20, 0
      %p114 = por %p112, %p113
      %p115 = scmp.ne.s32.totalorder %s101, %s102
      %p116 = scmp.eq.s32.totalorder %s21, 9
      %p117 = por %p115, %p116
      %p119 = scmp.ne.s32.totalorder %s102, %s118
      %p120 = scmp.eq.s32.totalorder %s21, 0
      %p121 = por %p119, %p120
      %s122 = ssub.s32 %s15, %s22
      %p123 = scmp.eq.s32.totalorder %s122, 0
      %s125 = sadd.s32 %s124, 1
      %s126 = scalar_select %p123, %s124, %s125
      %p129 = pneg %p123
      %p130 = scmp.eq.s32.totalorder %s15, 9
      %p131 = por %p129, %p130
      %p132 = scmp.ne.s32.totalorder %s124, %s127
      %p133 = scmp.eq.s32.totalorder %s15, 0
      %p134 = por %p132, %p133
      %p135 = scmp.ne.s32.totalorder %s124, %s127
      %p136 = scmp.eq.s32.totalorder %s20, 9
      %p137 = por %p135, %p136
      %p138 = scmp.ne.s32.totalorder %s127, %s128
      %p139 = scmp.eq.s32.totalorder %s20, 0
      %p140 = por %p138, %p139
      %p141 = scmp.ne.s32.totalorder %s127, %s128
      %p142 = scmp.eq.s32.totalorder %s21, 9
      %p143 = por %p141, %p142
      %p145 = scmp.ne.s32.totalorder %s128, %s144
      %p146 = scmp.eq.s32.totalorder %s21, 0
      %p147 = por %p145, %p146
      %s148 = ssub.s32 %s15, %s22
      %p149 = scmp.eq.s32.totalorder %s148, 0
      %s151 = sadd.s32 %s150, 1
      %s152 = scalar_select %p149, %s150, %s151
      %p155 = pneg %p149
      %p156 = scmp.eq.s32.totalorder %s15, 9
      %p157 = por %p155, %p156
      %p158 = scmp.ne.s32.totalorder %s150, %s153
      %p159 = scmp.eq.s32.totalorder %s15, 0
      %p160 = por %p158, %p159
      %p161 = scmp.ne.s32.totalorder %s150, %s153
      %p162 = scmp.eq.s32.totalorder %s20, 9
      %p163 = por %p161, %p162
      %p164 = scmp.ne.s32.totalorder %s153, %s154
      %p165 = scmp.eq.s32.totalorder %s20, 0
      %p166 = por %p164, %p165
      %p167 = scmp.ne.s32.totalorder %s153, %s154
      %p168 = scmp.eq.s32.totalorder %s21, 9
      %p169 = por %p167, %p168
      %p171 = scmp.ne.s32.totalorder %s154, %s170
      %p172 = scmp.eq.s32.totalorder %s21, 0
      %p173 = por %p171, %p172
      %p174 = scmp.le.s32.totalorder 1, %s15
      %p175 = scmp.lt.s32.totalorder %s15, 11
      %p176 = pnand %p174, %p175
      %p177 = pneg %p176
      // Predicated region
      $region9: #{run.9} parent=5 // pred_check
        _
      $region10: #{run.9} parent=5 // pred_check_branch
        %179 = sbr.rel (%p176) target = $region12
      $region11: #{run.9} parent=5 // pred_region
        %s180 = ssub.s32 %s15, 1
        // Predicated region
        $region13: #{run.9} parent=11 // pred_check
          %p181 = pneg %p36
        $region14: #{run.9} parent=11 // pred_check_branch
          %183 = sbr.rel (%p181) target = $region16
        $region15: #{run.9} parent=11 // pred_region
          _
        $region16: #{run.9} parent=11 // pred_fallthru
          _
      $region12: #{run.9} parent=5 // pred_fallthru
        _
      %p184 = scmp.lt.s32.totalorder %s15, 10
      // Predicated region
      $region17: #{run.9} parent=5 // pred_check
        %p185 = pneg %p184
      $region18: #{run.9} parent=5 // pred_check_branch
        %187 = sbr.rel (%p185) target = $region20
      $region19: #{run.9} parent=5 // pred_region
        // Predicated region
        $region21: #{run.9} parent=19 // pred_check
          %p188 = pneg %p56
        $region22: #{run.9} parent=19 // pred_check_branch
          %190 = sbr.rel (%p188) target = $region24
        $region23: #{run.9} parent=19 // pred_region
          %s191 = sand.u32 %s46, 1
          %s192 = sand.u32 %s46, 1
          %s193 = smul.addr %s192, 160
          %s194 = scalar_lea.vmem [#allocation2], %s193
          %s195 = smul.u32 2, %s15
          %s196 = smul.addr %s195, 4
          %s197 = scalar_lea.vmem %s1, %s196
          // Predicated region
          $region25: #{run.9} parent=23 // pred_check
            _
          $region26: #{run.9} parent=23 // pred_check_branch
            %199 = sbr.rel (0) target = $region28
          $region27: #{run.9} parent=23 // pred_region
            // Predicated region
            $region29: #{run.9} parent=27 // pred_check
              _
            $region30: #{run.9} parent=27 // pred_check_branch
              %201 = sbr.rel (0) target = $region32
            $region31: #{run.9} parent=27 // pred_region
              // Predicated region
              $region44: #{run.9} parent=31 // pred_check
                _
              $region45: #{run.9} parent=31 // pred_check_branch
                %255 = sbr.rel (0) target = $region47
              $region46: #{run.9} parent=31 // pred_region
                loop: start=0, step=1, limit=1
                $region48: #{run.9} parent=46 // loop_pre_header
                  _
                $region49: #{run.9} parent=46 // loop_header
                  %s257 = sphi 0, %s261
                  %p258 = scmp.ge.s32.totalorder %s257, 1
                  %s262 = sphi %s197, %s197
                  %s263 = sphi %s194, %s194
                $region50: #{run.9} parent=46 // loop_header_branch
                  %260 = sbr.rel (%p258) target = $region54
                $region51: #{run.9} parent=46 // loop_body
                  %v264 = vld [vmem:[%s262] sm:$0xff]
                  %265 = vst [vmem:[%s263] sm:$0xff] %v264
                  %v266 = vld [vmem:[%s262 + $0x50] sm:$0xff]
                  %267 = vst [vmem:[%s263 + $0x8] sm:$0xff] %v266
                  %v268 = vld [vmem:[%s262 + $0xa0] sm:$0xff]
                  %269 = vst [vmem:[%s263 + $0x10] sm:$0xff] %v268
                  %v270 = vld [vmem:[%s262 + $0xf0] sm:$0xff]
                  %271 = vst [vmem:[%s263 + $0x18] sm:$0xff] %v270
                  %v272 = vld [vmem:[%s262 + $0x140] sm:$0xff]
                  %273 = vst [vmem:[%s263 + $0x20] sm:$0xff] %v272
                  %v274 = vld [vmem:[%s262 + $0x190] sm:$0xff]
                  %275 = vst [vmem:[%s263 + $0x28] sm:$0xff] %v274
                  %v276 = vld [vmem:[%s262 + $0x1e0] sm:$0xff]
                  %277 = vst [vmem:[%s263 + $0x30] sm:$0xff] %v276
                  %v278 = vld [vmem:[%s262 + $0x230] sm:$0xff]
                  %279 = vst [vmem:[%s263 + $0x38] sm:$0xff] %v278
                  %v280 = vld [vmem:[%s262 + $0x280] sm:$0xff]
                  %281 = vst [vmem:[%s263 + $0x40] sm:$0xff] %v280
                  %v282 = vld [vmem:[%s262 + $0x2d0] sm:$0xff]
                  %283 = vst [vmem:[%s263 + $0x48] sm:$0xff] %v282
                  %v284 = vld [vmem:[%s262 + $0x320] sm:$0xff]
                  %285 = vst [vmem:[%s263 + $0x50] sm:$0xff] %v284
                  %v286 = vld [vmem:[%s262 + $0x370] sm:$0xff]
                  %287 = vst [vmem:[%s263 + $0x58] sm:$0xff] %v286
                  %v288 = vld [vmem:[%s262 + $0x3c0] sm:$0xff]
                  %289 = vst [vmem:[%s263 + $0x60] sm:$0xff] %v288
                  %v290 = vld [vmem:[%s262 + $0x410] sm:$0xff]
                  %291 = vst [vmem:[%s263 + $0x68] sm:$0xff] %v290
                  %v292 = vld [vmem:[%s262 + $0x460] sm:$0xff]
                  %293 = vst [vmem:[%s263 + $0x70] sm:$0xff] %v292
                  %v294 = vld [vmem:[%s262 + $0x4b0] sm:$0xff]
                  %295 = vst [vmem:[%s263 + $0x78] sm:$0xff] %v294
                  %v296 = vld [vmem:[%s262 + $0x500] sm:$0xff]
                  %297 = vst [vmem:[%s263 + $0x80] sm:$0xff] %v296
                  %v298 = vld [vmem:[%s262 + $0x550] sm:$0xff]
                  %299 = vst [vmem:[%s263 + $0x88] sm:$0xff] %v298
                  %v300 = vld [vmem:[%s262 + $0x5a0] sm:$0xff]
                  %301 = vst [vmem:[%s263 + $0x90] sm:$0xff] %v300
                  %v302 = vld [vmem:[%s262 + $0x5f0] sm:$0xff]
                  %303 = vst [vmem:[%s263 + $0x98] sm:$0xff] %v302
                $region52: #{run.9} parent=46 // loop_footer
                  %s261 = sadd.s32 1, %s257
                $region53: #{run.9} parent=46 // loop_footer_branch
                  %256 = sbr.rel target = $region49
                $region54: #{run.9} parent=46 // loop_exit
                  _
              $region47: #{run.9} parent=31 // pred_fallthru
                _
              // Predicated region
              $region55: #{run.9} parent=31 // pred_check
                _
              $region56: #{run.9} parent=31 // pred_check_branch
                %305 = sbr.rel target = $region58
              $region57: #{run.9} parent=31 // pred_region
                _
              $region58: #{run.9} parent=31 // pred_fallthru
                _
            $region32: #{run.9} parent=27 // pred_fallthru
              _
            // Predicated region
            $region33: #{run.9} parent=27 // pred_check
              _
            $region34: #{run.9} parent=27 // pred_check_branch
              %203 = sbr.rel target = $region36
            $region35: #{run.9} parent=27 // pred_region
              %s205 = ssub.s32 256, 1
              loop: start=0, step=1, limit=1
              $region37: #{run.9} parent=35 // loop_pre_header
                _
              $region38: #{run.9} parent=35 // loop_header
                %s207 = sphi 0, %s211
                %p208 = scmp.ge.s32.totalorder %s207, 1
                %s212 = sphi %s197, %s197
                %s213 = sphi %s194, %s194
              $region39: #{run.9} parent=35 // loop_header_branch
                %210 = sbr.rel (%p208) target = $region43
              $region40: #{run.9} parent=35 // loop_body
                %v214 = vld [vmem:[%s212] sm:%s205]
                %215 = vst [vmem:[%s213] sm:%s205] %v214
                %v216 = vld [vmem:[%s212 + $0x50] sm:%s205]
                %217 = vst [vmem:[%s213 + $0x8] sm:%s205] %v216
                %v218 = vld [vmem:[%s212 + $0xa0] sm:%s205]
                %219 = vst [vmem:[%s213 + $0x10] sm:%s205] %v218
                %v220 = vld [vmem:[%s212 + $0xf0] sm:%s205]
                %221 = vst [vmem:[%s213 + $0x18] sm:%s205] %v220
                %v222 = vld [vmem:[%s212 + $0x140] sm:%s205]
                %223 = vst [vmem:[%s213 + $0x20] sm:%s205] %v222
                %v224 = vld [vmem:[%s212 + $0x190] sm:%s205]
                %225 = vst [vmem:[%s213 + $0x28] sm:%s205] %v224
                %v226 = vld [vmem:[%s212 + $0x1e0] sm:%s205]
                %227 = vst [vmem:[%s213 + $0x30] sm:%s205] %v226
                %v228 = vld [vmem:[%s212 + $0x230] sm:%s205]
                %229 = vst [vmem:[%s213 + $0x38] sm:%s205] %v228
                %v230 = vld [vmem:[%s212 + $0x280] sm:%s205]
                %231 = vst [vmem:[%s213 + $0x40] sm:%s205] %v230
                %v232 = vld [vmem:[%s212 + $0x2d0] sm:%s205]
                %233 = vst [vmem:[%s213 + $0x48] sm:%s205] %v232
                %v234 = vld [vmem:[%s212 + $0x320] sm:%s205]
                %235 = vst [vmem:[%s213 + $0x50] sm:%s205] %v234
                %v236 = vld [vmem:[%s212 + $0x370] sm:%s205]
                %237 = vst [vmem:[%s213 + $0x58] sm:%s205] %v236
                %v238 = vld [vmem:[%s212 + $0x3c0] sm:%s205]
                %239 = vst [vmem:[%s213 + $0x60] sm:%s205] %v238
                %v240 = vld [vmem:[%s212 + $0x410] sm:%s205]
                %241 = vst [vmem:[%s213 + $0x68] sm:%s205] %v240
                %v242 = vld [vmem:[%s212 + $0x460] sm:%s205]
                %243 = vst [vmem:[%s213 + $0x70] sm:%s205] %v242
                %v244 = vld [vmem:[%s212 + $0x4b0] sm:%s205]
                %245 = vst [vmem:[%s213 + $0x78] sm:%s205] %v244
                %v246 = vld [vmem:[%s212 + $0x500] sm:%s205]
                %247 = vst [vmem:[%s213 + $0x80] sm:%s205] %v246
                %v248 = vld [vmem:[%s212 + $0x550] sm:%s205]
                %249 = vst [vmem:[%s213 + $0x88] sm:%s205] %v248
                %v250 = vld [vmem:[%s212 + $0x5a0] sm:%s205]
                %251 = vst [vmem:[%s213 + $0x90] sm:%s205] %v250
                %v252 = vld [vmem:[%s212 + $0x5f0] sm:%s205]
                %253 = vst [vmem:[%s213 + $0x98] sm:%s205] %v252
              $region41: #{run.9} parent=35 // loop_footer
                %s211 = sadd.s32 1, %s207
              $region42: #{run.9} parent=35 // loop_footer_branch
                %206 = sbr.rel target = $region38
              $region43: #{run.9} parent=35 // loop_exit
                _
            $region36: #{run.9} parent=27 // pred_fallthru
              _
          $region28: #{run.9} parent=23 // pred_fallthru
            _
          %306 = vnop
        $region24: #{run.9} parent=19 // pred_fallthru
          _
        // Predicated region
        $region59: #{run.9} parent=19 // pred_check
          %p307 = pneg %p82
        $region60: #{run.9} parent=19 // pred_check_branch
          %309 = sbr.rel (%p307) target = $region62
        $region61: #{run.9} parent=19 // pred_region
          %s310 = smul.u32 2, %s15
          %p311 = scmp.lt.s32.totalorder %s310, 19
          %s312 = scalar_select %p311, %s310, 19
          %s313 = scalar_lea.vmem %s2, %s312
          %s314 = smul.u32 2, %s15
        $region62: #{run.9} parent=19 // pred_fallthru
          _
        // Predicated region
        $region63: #{run.9} parent=19 // pred_check
          %p315 = pneg %p108
        $region64: #{run.9} parent=19 // pred_check_branch
          %317 = sbr.rel (%p315) target = $region66
        $region65: #{run.9} parent=19 // pred_region
          %p318 = scmp.lt.s32.totalorder %s15, 9
          %s319 = scalar_select %p318, %s15, 9
          %s320 = smul.addr %s319, 2
          %s321 = smul.addr %s320, 8
          %s322 = scalar_lea.vmem %s3, %s321
        $region66: #{run.9} parent=19 // pred_fallthru
          _
      $region20: #{run.9} parent=5 // pred_fallthru
        _
      %p323 = scmp.le.s32.totalorder 1, %s15
      %p324 = scmp.lt.s32.totalorder %s15, 11
      %p325 = pnand %p323, %p324
      %p326 = pneg %p325
      // Predicated region
      $region67: #{run.9} parent=5 // pred_check
        _
      $region68: #{run.9} parent=5 // pred_check_branch
        %328 = sbr.rel (%p325) target = $region70
      $region69: #{run.9} parent=5 // pred_region
        %s329 = ssub.s32 %s15, 1
        %s330 = sand.u32 %s49, 1
        %s331 = sand.u32 %s49, 1
        %s332 = smul.addr %s331, 160
        %s333 = scalar_lea.vmem [#allocation2], %s332
        // Predicated region
        $region71: #{run.9} parent=69 // pred_check
          %p334 = pneg %p62
        $region72: #{run.9} parent=69 // pred_check_branch
          %336 = sbr.rel (%p334) target = $region74
        $region73: #{run.9} parent=69 // pred_region
          _
        $region74: #{run.9} parent=69 // pred_fallthru
          _
        %p337 = pneg %p36
        %p338 = pneg %p33
        %s339 = sand.u32 %s49, 1
        %s340 = sand.u32 %s49, 1
        %s341 = smul.addr %s340, 160
        %s342 = scalar_lea.vmem [#allocation2], %s341
        %p343 = pneg %p62
        %p344 = pneg %p59
        %s345 = smul.u32 2, %s20
        %p346 = scmp.lt.s32.totalorder %s345, 19
        %s347 = scalar_select %p346, %s345, 19
        %s348 = scalar_lea.vmem %s2, %s347
        %p349 = pneg %p88
        %p350 = pneg %p85
        %p351 = scmp.lt.s32.totalorder %s20, 9
        %s352 = scalar_select %p351, %s20, 9
        %s353 = smul.addr %s352, 2
        %s354 = smul.addr %s353, 8
        %s355 = scalar_lea.vmem %s3, %s354
        %p356 = pneg %p114
        %p357 = pneg %p111
        %p358 = pneg %p140
        %p359 = pneg %p137
        %p360 = scmp.lt.s32.totalorder %s20, 9
        %s361 = scalar_select %p360, %s20, 9
        %s362 = smul.addr %s361, 2
        %s363 = smul.addr %s362, 8
        %s364 = scalar_lea.vmem %s4, %s363
        %p365 = pneg %p166
        %p366 = pneg %p163
        %s367 = sand.u32 %s153, 1
        %s368 = scalar_lea.sflag [#allocation4], %s367
        %s369 = sand.u32 %s153, 1
        %s370 = smul.addr %s369, 16
        %s371 = scalar_lea.vmem [#allocation3], %s370
        %s372 = smul.u32 2, %s20
        %s373 = smul.u32 2, %s20
        %p374 = scmp.lt.s32.totalorder %s373, 19
        %s375 = scalar_select %p374, %s373, 19
        %s376 = scalar_lea.vmem %s2, %s375
        %s377 = smul.u32 2, %s20
        %p378 = scmp.lt.s32.totalorder %s20, 9
        %s379 = scalar_select %p378, %s20, 9
        %s380 = smul.addr %s379, 2
        %s381 = smul.addr %s380, 8
        %s382 = scalar_lea.vmem %s3, %s381
        %p383 = scmp.lt.s32.totalorder %s20, 9
        %s384 = scalar_select %p383, %s20, 9
        %s385 = smul.addr %s384, 2
        %s386 = smul.addr %s385, 8
        %s387 = scalar_lea.vmem %s4, %s386
        %v389 = vld [vmem:[%s0] sm:$0xff]
        %v390 = vld [vmem:[%s333] sm:$0xff]
        %v391 = vld [vmem:[%s333 + $0x8] sm:$0xff]
        %v392 = vld [vmem:[%s333 + $0x10] sm:$0xff]
        %v393 = vld [vmem:[%s333 + $0x18] sm:$0xff]
        %v394 = vld [vmem:[%s333 + $0x20] sm:$0xff]
        %v395 = vld [vmem:[%s333 + $0x28] sm:$0xff]
        %v396 = vld [vmem:[%s333 + $0x30] sm:$0xff]
        %v397 = vld [vmem:[%s333 + $0x38] sm:$0xff]
        %v398 = vld [vmem:[%s333 + $0x40] sm:$0xff]
        %v399 = vld [vmem:[%s333 + $0x48] sm:$0xff]
        %v400 = vld [vmem:[%s333 + $0x50] sm:$0xff]
        %v401 = vld [vmem:[%s333 + $0x58] sm:$0xff]
        %v402 = vld [vmem:[%s333 + $0x60] sm:$0xff]
        %v403 = vld [vmem:[%s333 + $0x68] sm:$0xff]
        %v404 = vld [vmem:[%s333 + $0x70] sm:$0xff]
        %v405 = vld [vmem:[%s333 + $0x78] sm:$0xff]
        %v406 = vld [vmem:[%s333 + $0x80] sm:$0xff]
        %v407 = vld [vmem:[%s333 + $0x88] sm:$0xff]
        %v408 = vld [vmem:[%s333 + $0x90] sm:$0xff]
        %v409 = vld [vmem:[%s333 + $0x98] sm:$0xff]
        %v410 = vld [vmem:[%s376] sm:$0x3]
        %v412 = vperm.slane %v410, 0
        %v413 = vperm.slane %v410, 1
        %v417 = vunpack.c.l.b16 %v389
        %v418 = vunpack.c.h.b16 %v389
        %v419 = vpack.c.b16 %v417, %v417
        %v420 = vpack.c.b16 %v418, %v418
        %v442 = vunpack.c.l.b16 %v390
        %v443 = vunpack.c.h.b16 %v390
        %v444 = vunpack.c.l.b16 %v391
        %v445 = vunpack.c.h.b16 %v391
        %v446 = vunpack.c.l.b16 %v392
        %v447 = vunpack.c.h.b16 %v392
        %v448 = vunpack.c.l.b16 %v393
        %v449 = vunpack.c.h.b16 %v393
        %v450 = vunpack.c.l.b16 %v394
        %v451 = vunpack.c.h.b16 %v394
        %v452 = vunpack.c.l.b16 %v395
        %v453 = vunpack.c.h.b16 %v395
        %v454 = vunpack.c.l.b16 %v396
        %v455 = vunpack.c.h.b16 %v396
        %v456 = vunpack.c.l.b16 %v397
        %v457 = vunpack.c.h.b16 %v397
        %v458 = vunpack.c.l.b16 %v398
        %v459 = vunpack.c.h.b16 %v398
        %v460 = vunpack.c.l.b16 %v399
        %v461 = vunpack.c.h.b16 %v399
        %v462 = vunpack.c.l.b16 %v400
        %v463 = vunpack.c.h.b16 %v400
        %v464 = vunpack.c.l.b16 %v401
        %v465 = vunpack.c.h.b16 %v401
        %v466 = vunpack.c.l.b16 %v402
        %v467 = vunpack.c.h.b16 %v402
        %v468 = vunpack.c.l.b16 %v403
        %v469 = vunpack.c.h.b16 %v403
        %v470 = vunpack.c.l.b16 %v404
        %v471 = vunpack.c.h.b16 %v404
        %v472 = vunpack.c.l.b16 %v405
        %v473 = vunpack.c.h.b16 %v405
        %v474 = vunpack.c.l.b16 %v406
        %v475 = vunpack.c.h.b16 %v406
        %v476 = vunpack.c.l.b16 %v407
        %v477 = vunpack.c.h.b16 %v407
        %v478 = vunpack.c.l.b16 %v408
        %v479 = vunpack.c.h.b16 %v408
        %v480 = vunpack.c.l.b16 %v409
        %v481 = vunpack.c.h.b16 %v409
        %v482 = vpack.c.b16 %v444, %v442
        %v483 = vpack.c.b16 %v445, %v443
        %v484 = vpack.c.b16 %v448, %v446
        %v485 = vpack.c.b16 %v449, %v447
        %v486 = vpack.c.b16 %v452, %v450
        %v487 = vpack.c.b16 %v453, %v451
        %v488 = vpack.c.b16 %v456, %v454
        %v489 = vpack.c.b16 %v457, %v455
        %v490 = vpack.c.b16 %v460, %v458
        %v491 = vpack.c.b16 %v461, %v459
        %v492 = vpack.c.b16 %v464, %v462
        %v493 = vpack.c.b16 %v465, %v463
        %v494 = vpack.c.b16 %v468, %v466
        %v495 = vpack.c.b16 %v469, %v467
        %v496 = vpack.c.b16 %v472, %v470
        %v497 = vpack.c.b16 %v473, %v471
        %v498 = vpack.c.b16 %v476, %v474
        %v499 = vpack.c.b16 %v477, %v475
        %v500 = vpack.c.b16 %v480, %v478
        %v501 = vpack.c.b16 %v481, %v479
        %vm522 = vcmask 261120
        %v524 = vsel %vm522, %v420, 0
        %526 = vmatpush.bf16.msra.mxu0 %v496
        %527 = vmatpush.bf16.msra.mxu0 %v494
        %528 = vmatpush.bf16.msra.mxu0 %v492
        %529 = vmatpush.bf16.msra.mxu0 %v490
        %530 = vmatpush.bf16.msra.mxu0 %v488
        %531 = vmatpush.bf16.msra.mxu0 %v486
        %532 = vmatpush.bf16.msra.mxu0 %v484
        %533 = vmatpush.bf16.msra.mxu0 %v482
        %534 = vmatmul.bf16.gmra.mxu0 %v419
        %v535 = vpop.f32.mrf.mxu0
        %v536 = vadd.f32 %v412, %v535
        %v537 = vpop.f32.mrf.mxu0
        %538 = vdwg.mxu0
        %539 = vmatpush.bf16.msra.mxu0 0
        %540 = vmatpush.bf16.msra.mxu0 0
        %541 = vmatpush.bf16.msra.mxu0 0
        %542 = vmatpush.bf16.msra.mxu0 0
        %543 = vmatpush.bf16.msra.mxu0 0
        %544 = vmatpush.bf16.msra.mxu0 0
        %545 = vmatpush.bf16.msra.mxu0 %v500
        %546 = vmatpush.bf16.msra.mxu0 %v498
        %547 = vmatmul.bf16.gmra.mxu0 %v524
        %v548 = vpop.f32.mrf.mxu0
        %v549 = vadd.f32 %v536, %v548
        %v550 = vpop.f32.mrf.mxu0
        %551 = vdwg.mxu0
        %552 = vmatpush.bf16.msra.mxu0 %v497
        %553 = vmatpush.bf16.msra.mxu0 %v495
        %554 = vmatpush.bf16.msra.mxu0 %v493
        %555 = vmatpush.bf16.msra.mxu0 %v491
        %556 = vmatpush.bf16.msra.mxu0 %v489
        %557 = vmatpush.bf16.msra.mxu0 %v487
        %558 = vmatpush.bf16.msra.mxu0 %v485
        %559 = vmatpush.bf16.msra.mxu0 %v483
        %560 = vmatmul.bf16.gmra.mxu0 %v419
        %v561 = vpop.f32.mrf.mxu0
        %v562 = vadd.f32 %v413, %v561
        %v563 = vpop.f32.mrf.mxu0
        %564 = vdwg.mxu0
        %565 = vmatpush.bf16.msra.mxu0 0
        %566 = vmatpush.bf16.msra.mxu0 0
        %567 = vmatpush.bf16.msra.mxu0 0
        %568 = vmatpush.bf16.msra.mxu0 0
        %569 = vmatpush.bf16.msra.mxu0 0
        %570 = vmatpush.bf16.msra.mxu0 0
        %571 = vmatpush.bf16.msra.mxu0 %v501
        %572 = vmatpush.bf16.msra.mxu0 %v499
        %573 = vmatmul.bf16.gmra.mxu0 %v524
        %v574 = vpop.f32.mrf.mxu0
        %v575 = vadd.f32 %v562, %v574
        %v576 = vpop.f32.mrf.mxu0
        %577 = vdwg.mxu0
        %v578 = vmax.f32 %v549, %v575
        %579 = vmax.xlane.f32.xlu0 %v578
        %v580 = vpop.xlane.xlu0 %579
        %v581 = vsub.f32 %v549, %v580
        %v582 = vsub.f32 %v575, %v580
        %v583 = vmul.f32 %v581, 1.442695
        %v584 = vpow.pop %v583
        %v585 = vmul.f32 %v582, 1.442695
        %v586 = vpow.pop %v585
        %v587 = vadd.f32 %v584, %v586
        %588 = vadd.xlane.f32.xlu0 %v587
        %v589 = vpop.xlane.xlu0 %588
        %v590 = vrcp.pop %v589
        %v591 = vmul.f32 %v589, %v590
        %v592 = vsub.f32 1.0, %v591
        %v593 = vmul.f32 %v590, %v592
        %v594 = vadd.f32 %v590, %v593
        %vm595 = vweird.f32 %v589
        %vm596 = vweird.f32 %v590
        %vm597 = vmor %vm595, %vm596
        %v598 = vsel %vm597, %v590, %v594
        %v599 = vand.u32 2147483647, %v589
        %vm600 = vcmp.eq.f32.partialorder %v599, 8.507059e+37
        %v601 = vand.u32 %v589, 2147483648
        %v602 = vor.u32 1.1754944e-38, %v601
        %v603 = vsel %vm600, %v602, %v598
        %v604 = vmul.f32 %v584, %v603
        %v605 = vmul.f32 %v586, %v603
        %606 = vst [vmem:[%s371] sm:$0xff] %v604
        %607 = vst [vmem:[%s371 + $0x8] sm:$0xff] %v605
        %v608 = vmul.f32 %v604, 0.99
        %v609 = vmul.f32 %v605, 0.99
        %v610 = vadd.f32 %v608, 3.90625e-05
        %v611 = vadd.f32 %v609, 3.90625e-05
        %v612 = vlog2.pop %v610
        %v613 = vmul.f32 %v612, 0.6931472
        %v614 = vlog2.pop %v611
        %v615 = vmul.f32 %v614, 0.6931472
        %v616 = vld [vmem:[%s382] sm:$0xff]
        %v617 = vld [vmem:[%s382 + $0x8] sm:$0xff]
        %v618 = vadd.f32 %v613, %v616
        %v619 = vadd.f32 %v615, %v617
        %v620 = vmax.f32 %v618, %v619
        %621 = vmax.xlane.f32.xlu0 %v620
        %v622 = vpop.xlane.xlu0 %621
        %v623 = vsub.f32 %v618, %v622
        %v624 = vsub.f32 %v619, %v622
        %v625 = vmul.f32 %v623, 1.442695
        %v626 = vpow.pop %v625
        %v627 = vmul.f32 %v624, 1.442695
        %v628 = vpow.pop %v627
        %v629 = vadd.f32 %v626, %v628
        %630 = vadd.xlane.f32.xlu0 %v629
        %v631 = vpop.xlane.xlu0 %630
        %v632 = vrcp.pop %v631
        %v633 = vmul.f32 %v626, %v632
        %v634 = vmul.f32 %v628, %v632
        %v635 = vlaneseq
        %v636 = vand.u32 %v635, 127
        %v637 = vadd.s32 %v636, 128
        %vm638 = vcmp.eq.f32.partialorder %v618, %v622
        %vm639 = vcmp.eq.f32.partialorder %v619, %v622
        %v640 = vsel %vm638, %v636, 256
        %v641 = vsel %vm639, %v637, 256
        %vm642 = vcmp.lt.s32.totalorder %v640, %v641
        %v643 = vsel %vm642, %v640, %v641
        %v644 = vand.u32 %v643, 65535
        %v645 = vshra.s32 %v643, 16
        %v646 = vcvt.s32.f32 %v644
        %v647 = vcvt.s32.f32 %v645
        %648 = vmin.xlane.f32.xlu0 %v647
        %v649 = vpop.xlane.xlu0 %648
        %vm650 = vcmp.eq.f32.partialorder %v647, %v649
        %v651 = vsel %vm650, %v646, inf
        %652 = vmin.xlane.f32.xlu0 %v651
        %v653 = vpop.xlane.xlu0 %652
        %v654 = vcvt.f32.s32 %v653
        %v655 = vcvt.f32.s32 %v649
        %v656 = vshll.u32 %v655, 16
        %v657 = vadd.s32 %v656, %v654
        %vm658 = vcmp.eq.s32.totalorder %v636, %v657
        %vm659 = vcmp.eq.s32.totalorder %v637, %v657
        %v660 = vsel %vm658, 1, 0
        %v661 = vsel %vm659, 1, 0
        %v662 = vcvt.s32.f32 %v660
        %v663 = vcvt.s32.f32 %v661
        %v664 = vsub.f32 %v662, %v633
        %v665 = vsub.f32 %v663, %v634
        %v666 = vadd.f32 %v664, %v633
        %v667 = vadd.f32 %v665, %v634
        %668 = vst [vmem:[%s387] sm:$0xff] %v666
        %669 = vst [vmem:[%s387 + $0x8] sm:$0xff] %v667
        %p670 = scmp.lt.s32.totalorder %s20, 9
        %s671 = scalar_select %p670, %s20, 9
        %s672 = smul.addr %s671, 2
        %s673 = smul.addr %s672, 8
        %s674 = scalar_lea.vmem %s4, %s673
        %s675 = sand.u32 %s153, 1
        %s676 = scalar_lea.sflag [#allocation4], %s675
        %s677 = sand.u32 %s153, 1
        %s678 = smul.addr %s677, 16
        %s679 = scalar_lea.vmem [#allocation3], %s678
        // Predicated region
        $region75: #{run.9} parent=69 // pred_check
          %p680 = pneg %p137
        $region76: #{run.9} parent=69 // pred_check_branch
          %682 = sbr.rel (%p680) target = $region78
        $region77: #{run.9} parent=69 // pred_region
          _
        $region78: #{run.9} parent=69 // pred_fallthru
          _
        // Predicated region
        $region79: #{run.9} parent=69 // pred_check
          %p683 = pneg %p163
        $region80: #{run.9} parent=69 // pred_check_branch
          %685 = sbr.rel (%p683) target = $region82
        $region81: #{run.9} parent=69 // pred_region
          %687 = vsyncadd %s676, 0
          %s688 = smul.addr %s20, 2
          %s689 = smul.addr %s688, 8
          %s690 = scalar_lea.hbm %s5, %s689
          %s692 = sshll.u32 %s679, 4
          %s693 = int_to_ptr.vmem [resolvable:$true] %s692
          %s694 = sshll.u32 %s690, 4
          %s695 = int_to_ptr.hbm [resolvable:$true] %s694
          %697 = dma.vmem_to_hbm [thread:$0]  %s693, 256, %s695, %s676
        $region82: #{run.9} parent=69 // pred_fallthru
          _
      $region70: #{run.9} parent=5 // pred_fallthru
        _
      %p698 = scmp.le.s32.totalorder 2, %s15
      // Predicated region
      $region83: #{run.9} parent=5 // pred_check
        %p699 = pneg %p698
      $region84: #{run.9} parent=5 // pred_check_branch
        %701 = sbr.rel (%p699) target = $region86
      $region85: #{run.9} parent=5 // pred_region
        %s702 = ssub.s32 %s15, 2
        // Predicated region
        $region87: #{run.9} parent=85 // pred_check
          %p703 = pneg %p143
        $region88: #{run.9} parent=85 // pred_check_branch
          %705 = sbr.rel (%p703) target = $region90
        $region89: #{run.9} parent=85 // pred_region
          %p706 = scmp.lt.s32.totalorder %s21, 9
          %s707 = scalar_select %p706, %s21, 9
          %s708 = smul.addr %s707, 2
          %s709 = smul.addr %s708, 8
          %s710 = scalar_lea.vmem %s4, %s709
        $region90: #{run.9} parent=85 // pred_fallthru
          _
        // Predicated region
        $region91: #{run.9} parent=85 // pred_check
          %p711 = pneg %p169
        $region92: #{run.9} parent=85 // pred_check_branch
          %713 = sbr.rel (%p711) target = $region94
        $region93: #{run.9} parent=85 // pred_region
          %s714 = sand.u32 %s154, 1
          %s715 = scalar_lea.sflag [#allocation4], %s714
          %s716 = sand.u32 %s154, 1
          %s717 = smul.addr %s716, 16
          %s718 = scalar_lea.vmem [#allocation3], %s717
          %720 = dma.done %s715, 256
        $region94: #{run.9} parent=85 // pred_fallthru
          _
      $region86: #{run.9} parent=5 // pred_fallthru
        _
    $region6: #{run.9} parent=1 // loop_footer
      %s19 = sadd.s32 1, %s15
    $region7: #{run.9} parent=1 // loop_footer_branch
      %14 = sbr.rel target = $region3
    $region8: #{run.9} parent=1 // loop_exit
      _
    %721 = vsyncpa [#allocation4], 1
    %s722 = scalar_lea.sflag [#allocation4], 1
    %723 = vsyncpa %s722, 1

</llo_original>
